<compile_context>
chip_gen: v5e
topology: v5e:2x2
jax: 0.10.0
libtpu: 0.0.40
codegen_flags: <defaults>
</compile_context>

<pallas_src>
import functools

import jax
import jax.numpy as jnp
from jax import lax
from jax.experimental import pallas as pl
from jax.experimental.pallas import tpu as pltpu


# ---------------------------------------------------------------------------
# Kernel
# ---------------------------------------------------------------------------
def _attention_kernel(x_seq_ref, x_tile_ref, wq_ref, bq_ref, wkv_ref, bkv_ref,
                      wo_ref, bo_ref, gamma_ref, beta_ref, out_ref,
                      k_scratch, v_scratch,
                      *, num_heads, head_dim, hidden, seq_len, q_tile, k_chunk,
                      eps):
    qi = pl.program_id(1)

    # ---- fused K/V projection for the full sequence, once per batch elem ----
    # Single (S, H) @ (H, 2H) MXU op; results stored lane-dense (S, H) bf16.
    # TODO(synk): spread this projection across q-tile steps (or hoist it to a
    # preceding pallas_call) to hide the qi==0 bubble at each batch boundary.
    @pl.when(qi == 0)
    def _():
        xb = x_seq_ref[0]                                          # (S, H) bf16
        kv = jnp.dot(xb, wkv_ref[...],
                     preferred_element_type=jnp.float32) + bkv_ref[...]
        kv = kv.astype(jnp.bfloat16)                               # (S, 2H)
        k_scratch[...] = kv[:, :hidden]
        v_scratch[...] = kv[:, hidden:]

    # ---- Q projection for this query tile (1/sqrt(dH) folded into wq/bq) ----
    x_q = x_tile_ref[0]                                            # (tq, H) f32
    q = jnp.dot(x_q.astype(jnp.bfloat16), wq_ref[...],
                preferred_element_type=jnp.float32) + bq_ref[...]
    q_h = q.astype(jnp.bfloat16).reshape(q_tile, num_heads, head_dim)

    # ---- streamed (online-softmax) attention over K/V chunks ---------------
    # TODO(synk): attention_mask (None here) would be added to `s` below.
    m = l = acc = None
    num_chunks = seq_len // k_chunk
    for c in range(num_chunks):                                    # static unroll
        k_c = k_scratch[pl.ds(c * k_chunk, k_chunk), :]            # (kc, H) bf16
        v_c = v_scratch[pl.ds(c * k_chunk, k_chunk), :]
        k_h = k_c.reshape(k_chunk, num_heads, head_dim)            # lazy head view
        v_h = v_c.reshape(k_chunk, num_heads, head_dim)

        s = jnp.einsum('qhd,khd->qhk', q_h, k_h,
                       preferred_element_type=jnp.float32)         # (tq, nH, kc)
        s_max = jnp.max(s, axis=-1, keepdims=True)
        if c == 0:
            m = s_max
            p = jnp.exp(s - m)
            l = jnp.sum(p, axis=-1, keepdims=True)
            acc = jnp.einsum('qhk,khd->qhd', p.astype(jnp.bfloat16), v_h,
                             preferred_element_type=jnp.float32)   # (tq, nH, dH)
        else:
            m_new = jnp.maximum(m, s_max)
            alpha = jnp.exp(m - m_new)
            p = jnp.exp(s - m_new)
            l = alpha * l + jnp.sum(p, axis=-1, keepdims=True)
            acc = alpha * acc + jnp.einsum('qhk,khd->qhd',
                                           p.astype(jnp.bfloat16), v_h,
                                           preferred_element_type=jnp.float32)
            m = m_new

    ctx = acc * pl.reciprocal(l)                                   # exact recip
    ctx = ctx.reshape(q_tile, hidden).astype(jnp.bfloat16)         # merge heads

    # ---- output dense: one (tq, H) @ (H, H) matmul (full-width contraction) -
    out = jnp.dot(ctx, wo_ref[...],
                  preferred_element_type=jnp.float32) + bo_ref[...]

    # ---- residual + LayerNorm (f32) -----------------------------------------
    y = out + x_q
    mean = jnp.mean(y, axis=-1, keepdims=True)
    var = jnp.mean((y - mean) ** 2, axis=-1, keepdims=True)
    y_norm = (y - mean) * lax.rsqrt(var + eps)
    out_ref[0] = (y_norm * gamma_ref[...] + beta_ref[...]).astype(out_ref.dtype)


# ---------------------------------------------------------------------------
# Config helpers (generation-aware tiling / VMEM budget)
# ---------------------------------------------------------------------------
def _vmem_capacity_bytes():
    try:
        info = pltpu.get_tpu_info()
        return int(getattr(info, "vmem_capacity_bytes", 64 * 1024 * 1024))
    except Exception:
        return 64 * 1024 * 1024      # conservative fallback (v7x-sized)


def _pick_q_tile(seq_len, vmem_cap):
    # Bigger tiles where VMEM is plentiful (v5e/v6e: 128 MiB), conservative on
    # v7x (64 MiB per TensorCore).
    target = 256 if vmem_cap >= (96 << 20) else 128
    if seq_len <= target:
        return seq_len
    for t in range(target, 7, -1):
        if seq_len % t == 0 and t % 8 == 0:
            return t
    # TODO(synk): pad odd sequence lengths instead of falling back to S.
    return seq_len


def _pick_k_chunk(seq_len):
    # Stream K/V so the (tq, nH, kc) f32 score slab stays bounded at long S.
    if seq_len <= 1024:
        return seq_len
    for kc in (1024, 512, 256, 128):
        if seq_len % kc == 0:
            return kc
    return seq_len


def _pick_vmem_limit(seq_len, hidden, q_tile, num_heads, k_chunk, vmem_cap):
    bf16, f32 = 2, 4
    weights = (2 * hidden * hidden + hidden * 2 * hidden) * bf16   # wq, wo, wkv
    biases = 8 * hidden * f32
    x_seq = 2 * seq_len * hidden * bf16            # double-buffered bf16 x
    x_tile = 2 * q_tile * hidden * f32
    out_blk = 2 * q_tile * hidden * f32
    scratch = 2 * seq_len * hidden * bf16          # K + V caches
    working = 3 * q_tile * num_heads * k_chunk * f32 + 6 * q_tile * hidden * f32
    est = weights + biases + x_seq + x_tile + out_blk + scratch + working
    limit = int(est * 1.5) + (16 << 20)            # compiler-internal headroom
    limit = max(limit, 32 << 20)
    return min(limit, (vmem_cap * 3) // 4)         # never the full physical VMEM


def _invariant_spec(shape):
    """BlockSpec for grid-invariant operands (weights/biases/LN params)."""
    index_map = lambda b, qi: (0,) * len(shape)
    if hasattr(pl, "Buffered"):
        try:
            # Constant index_map across the grid -> single buffering is enough.
            return pl.BlockSpec(shape, index_map, pipeline_mode=pl.Buffered(1))
        except (TypeError, ValueError):
            pass
    return pl.BlockSpec(shape, index_map)


# ---------------------------------------------------------------------------
# Wrapper
# ---------------------------------------------------------------------------
def custom_attention(hidden_states, params, *, num_heads, eps=1e-12, q_tile=None):
    """hidden_states: (B, S, H) float32. params: weights (in,out), biases/LN (1,H)."""
    B, S, H = hidden_states.shape
    head_dim = H // num_heads
    assert head_dim * num_heads == H, "hidden size must divide num_heads"

    vmem_cap = _vmem_capacity_bytes()
    if q_tile is None:
        q_tile = _pick_q_tile(S, vmem_cap)
    assert S % q_tile == 0, "sequence length must be divisible by the query tile"
    num_q_tiles = S // q_tile
    k_chunk = _pick_k_chunk(S)
    vmem_limit = _pick_vmem_limit(S, H, q_tile, num_heads, k_chunk, vmem_cap)

    scale = 1.0 / float(head_dim) ** 0.5
    f32, bf16 = jnp.float32, jnp.bfloat16
    # bf16 weights feed the MXU directly; the softmax scale is folded into wq/bq.
    wq = (params["wq"].astype(f32) * scale).astype(bf16)
    bq = params["bq"].astype(f32) * scale
    wkv = jnp.concatenate([params["wk"].astype(bf16),
                           params["wv"].astype(bf16)], axis=1)     # (H, 2H)
    bkv = jnp.concatenate([params["bk"].astype(f32),
                           params["bv"].astype(f32)], axis=1)      # (1, 2H)
    wo = params["wo"].astype(bf16)
    bo = params["bo"].astype(f32)
    gamma = params["ln_gamma"].astype(f32)
    beta = params["ln_beta"].astype(f32)

    x_seq_bf16 = hidden_states.astype(bf16)   # K/V projection source (half DMA)

    kernel = functools.partial(
        _attention_kernel, num_heads=num_heads, head_dim=head_dim, hidden=H,
        seq_len=S, q_tile=q_tile, k_chunk=k_chunk, eps=eps)

    x_seq_spec = pl.BlockSpec((1, S, H), lambda b, qi: (b, 0, 0))
    x_tile_spec = pl.BlockSpec((1, q_tile, H), lambda b, qi: (b, qi, 0))
    out_spec = pl.BlockSpec((1, q_tile, H), lambda b, qi: (b, qi, 0))

    # TODO(synk): for v7x dual-TensorCore at tiny batch, hoist the K/V
    # projection out of this kernel so the q-tile axis can be marked parallel.
    return pl.pallas_call(
        kernel,
        out_shape=jax.ShapeDtypeStruct((B, S, H), hidden_states.dtype),
        grid_spec=pltpu.PrefetchScalarGridSpec(
            num_scalar_prefetch=0,
            grid=(B, num_q_tiles),
            in_specs=[
                x_seq_spec,                        # bf16 x (K/V projection source)
                x_tile_spec,                       # f32 x tile (Q + residual)
                _invariant_spec((H, H)),           # wq (scale folded in)
                _invariant_spec((1, H)),           # bq (scale folded in)
                _invariant_spec((H, 2 * H)),       # fused [wk | wv]
                _invariant_spec((1, 2 * H)),       # fused [bk | bv]
                _invariant_spec((H, H)),           # wo
                _invariant_spec((1, H)),           # bo
                _invariant_spec((1, H)),           # layernorm gamma
                _invariant_spec((1, H)),           # layernorm beta
            ],
            out_specs=out_spec,
            scratch_shapes=[
                pltpu.VMEM((S, H), jnp.bfloat16),  # K cache (lane-dense, per b)
                pltpu.VMEM((S, H), jnp.bfloat16),  # V cache (lane-dense, per b)
            ],
        ),
        compiler_params=pltpu.CompilerParams(
            # Batch axis shards across TensorCores; the query-tile axis must
            # stay sequential so the K/V scratch computed at qi==0 is reusable.
            dimension_semantics=("parallel", "arbitrary"),
            vmem_limit_bytes=vmem_limit,
        ),
    )(x_seq_bf16, hidden_states,
      wq, bq, wkv, bkv, wo, bo, gamma, beta)


# ---------------------------------------------------------------------------
# Pure-JAX reference (mirrors the PyTorch forward, eval mode, mask=None)
# ---------------------------------------------------------------------------
def _reference(hidden_states, params, *, num_heads, eps=1e-12):
    B, S, H = hidden_states.shape
    dH = H // num_heads
    x = hidden_states.astype(jnp.float32)

    def lin(t, w, b):
        return t @ w.astype(jnp.float32) + b.astype(jnp.float32)

    def split_heads(t):  # (B, S, H) -> (B, nH, S, dH)
        return t.reshape(B, S, num_heads, dH).transpose(0, 2, 1, 3)

    q = split_heads(lin(x, params["wq"], params["bq"]))
    k = split_heads(lin(x, params["wk"], params["bk"]))
    v = split_heads(lin(x, params["wv"], params["bv"]))

    scores = jnp.einsum("bhqd,bhkd->bhqk", q, k) / jnp.sqrt(jnp.float32(dH))
    probs = jax.nn.softmax(scores, axis=-1)
    ctx = jnp.einsum("bhqk,bhkd->bhqd", probs, v)
    ctx = ctx.transpose(0, 2, 1, 3).reshape(B, S, H)

    out = lin(ctx, params["wo"], params["bo"])
    y = out + x
    mean = jnp.mean(y, axis=-1, keepdims=True)
    var = jnp.mean((y - mean) ** 2, axis=-1, keepdims=True)
    return (y - mean) / jnp.sqrt(var + eps) * params["ln_gamma"] + params["ln_beta"]


def init_params(key, hidden_size):
    """Deterministic synthetic parameter init (not a checkpoint load)."""
    ks = jax.random.split(key, 5)
    scale = 1.0 / jnp.sqrt(jnp.float32(hidden_size))

    def w(k):  # weights kept bf16 on host (MXU-native, half the DMA bytes)
        return (jax.random.normal(k, (hidden_size, hidden_size), jnp.float32)
                * scale).astype(jnp.bfloat16)

    return {
        "wq": w(ks[0]), "wk": w(ks[1]), "wv": w(ks[2]), "wo": w(ks[3]),
        "bq": jnp.full((1, hidden_size), 0.01, jnp.float32),
        "bk": jnp.full((1, hidden_size), -0.01, jnp.float32),
        "bv": jnp.full((1, hidden_size), 0.02, jnp.float32),
        "bo": jnp.full((1, hidden_size), 0.0, jnp.float32),
        "ln_gamma": jnp.ones((1, hidden_size), jnp.float32),
        "ln_beta": jnp.zeros((1, hidden_size), jnp.float32),
    }


if __name__ == "__main__":
    # Small config consistent with the module: hidden divisible by num_heads.
    B, S, H, NUM_HEADS = 2, 8, 32, 4
    key = jax.random.PRNGKey(0)
    k_x, k_p = jax.random.split(key)

    hidden_states = jax.random.normal(k_x, (B, S, H), jnp.float32)
    params = init_params(k_p, H)

    out = custom_attention(hidden_states, params, num_heads=NUM_HEADS)
    out = jax.block_until_ready(out)

    ref = _reference(hidden_states, params, num_heads=NUM_HEADS)
    assert out.shape == (B, S, H)
    # bf16 MXU operands -> loosened tolerance vs the f32 reference.
    assert jnp.allclose(out, ref, atol=3e-2, rtol=3e-2), "mismatch vs JAX reference"

    print("KERNEL_OK")
</pallas_src>

<mosaic_0001>
module attributes {stable_mosaic.version = 11 : i64} {
  func.func @_attention_kernel(%arg0: i32, %arg1: i32, %arg2: memref<1x8x32xbf16, #tpu.memory_space<vmem>>, %arg3: memref<1x8x32xf32, #tpu.memory_space<vmem>>, %arg4: memref<32x32xbf16, #tpu.memory_space<vmem>>, %arg5: memref<1x32xf32, #tpu.memory_space<vmem>>, %arg6: memref<32x64xbf16, #tpu.memory_space<vmem>>, %arg7: memref<1x64xf32, #tpu.memory_space<vmem>>, %arg8: memref<32x32xbf16, #tpu.memory_space<vmem>>, %arg9: memref<1x32xf32, #tpu.memory_space<vmem>>, %arg10: memref<1x32xf32, #tpu.memory_space<vmem>>, %arg11: memref<1x32xf32, #tpu.memory_space<vmem>>, %arg12: memref<1x8x32xf32, #tpu.memory_space<vmem>>, %arg13: memref<8x32xbf16, #tpu.memory_space<vmem>>, %arg14: memref<8x32xbf16, #tpu.memory_space<vmem>>) attributes {dimension_semantics = [#tpu.dimension_semantics<parallel>, #tpu.dimension_semantics<arbitrary>], iteration_bounds = array<i64: 2, 1>, scalar_prefetch = 0 : i64, scratch_operands = 2 : i64, tpu.core_type = #tpu.core_type<tc>, window_params = [{transform_indices = @transform_0, window_bounds = array<i64: 1, 8, 32>}, {transform_indices = @transform_1, window_bounds = array<i64: 1, 8, 32>}, {pipeline_mode = #tpu.pipeline_mode<synchronous>, transform_indices = @transform_2, window_bounds = array<i64: 32, 32>}, {pipeline_mode = #tpu.pipeline_mode<synchronous>, transform_indices = @transform_3, window_bounds = array<i64: 1, 32>}, {pipeline_mode = #tpu.pipeline_mode<synchronous>, transform_indices = @transform_4, window_bounds = array<i64: 32, 64>}, {pipeline_mode = #tpu.pipeline_mode<synchronous>, transform_indices = @transform_5, window_bounds = array<i64: 1, 64>}, {pipeline_mode = #tpu.pipeline_mode<synchronous>, transform_indices = @transform_6, window_bounds = array<i64: 32, 32>}, {pipeline_mode = #tpu.pipeline_mode<synchronous>, transform_indices = @transform_7, window_bounds = array<i64: 1, 32>}, {pipeline_mode = #tpu.pipeline_mode<synchronous>, transform_indices = @transform_8, window_bounds = array<i64: 1, 32>}, {pipeline_mode = #tpu.pipeline_mode<synchronous>, transform_indices = @transform_9, window_bounds = array<i64: 1, 32>}, {transform_indices = @transform_10, window_bounds = array<i64: 1, 8, 32>}]} {
    %c0_i32 = arith.constant 0 : i32
    %0 = arith.cmpi eq, %arg1, %c0_i32 : i32
    %1 = arith.extui %0 : i1 to i32
    %c0_i32_0 = arith.constant 0 : i32
    %2 = arith.cmpi ne, %1, %c0_i32_0 : i32
    scf.if %2 {
      %c0_32 = arith.constant 0 : index
      %c0_33 = arith.constant 0 : index
      %c0_34 = arith.constant 0 : index
      %67 = vector.load %arg2[%c0_32, %c0_33, %c0_34] : memref<1x8x32xbf16, #tpu.memory_space<vmem>>, vector<1x8x32xbf16>
      %68 = vector.shape_cast %67 : vector<1x8x32xbf16> to vector<8x32xbf16>
      %c0_35 = arith.constant 0 : index
      %c0_36 = arith.constant 0 : index
      %69 = vector.load %arg6[%c0_35, %c0_36] : memref<32x64xbf16, #tpu.memory_space<vmem>>, vector<32x64xbf16>
      %cst_37 = arith.constant dense<0.000000e+00> : vector<8x64xf32>
      %70 = tpu.matmul %68, %69, %cst_37 {dimension_numbers = #tpu.dot_dimension_numbers<[1], [0], [0], [1], [0, 0, 1, 1], [], []>} : vector<8x32xbf16>, vector<32x64xbf16>, vector<8x64xf32> -> vector<8x64xf32>
      %c0_38 = arith.constant 0 : index
      %c0_39 = arith.constant 0 : index
      %71 = vector.load %arg7[%c0_38, %c0_39] : memref<1x64xf32, #tpu.memory_space<vmem>>, vector<1x64xf32>
      %72 = vector.broadcast %71 : vector<1x64xf32> to vector<8x64xf32>
      %73 = arith.addf %70, %72 : vector<8x64xf32>
      %74 = arith.truncf %73 : vector<8x64xf32> to vector<8x64xbf16>
      %75 = vector.extract_strided_slice %74 {offsets = [0, 0], sizes = [8, 32], strides = [1, 1]} : vector<8x64xbf16> to vector<8x32xbf16>
      %c0_40 = arith.constant 0 : index
      %c0_41 = arith.constant 0 : index
      %76 = vector.load %arg13[%c0_40, %c0_41] : memref<8x32xbf16, #tpu.memory_space<vmem>>, vector<8x32xbf16>
      tpu.vector_store %arg13[%c0_40, %c0_41], %75 {strides = array<i32>} : memref<8x32xbf16, #tpu.memory_space<vmem>>, vector<8x32xbf16>,
      %77 = vector.extract_strided_slice %74 {offsets = [0, 32], sizes = [8, 32], strides = [1, 1]} : vector<8x64xbf16> to vector<8x32xbf16>
      %c0_42 = arith.constant 0 : index
      %c0_43 = arith.constant 0 : index
      %78 = vector.load %arg14[%c0_42, %c0_43] : memref<8x32xbf16, #tpu.memory_space<vmem>>, vector<8x32xbf16>
      tpu.vector_store %arg14[%c0_42, %c0_43], %77 {strides = array<i32>} : memref<8x32xbf16, #tpu.memory_space<vmem>>, vector<8x32xbf16>,
    } else {
    }
    %c0 = arith.constant 0 : index
    %c0_1 = arith.constant 0 : index
    %c0_2 = arith.constant 0 : index
    %3 = vector.load %arg3[%c0, %c0_1, %c0_2] : memref<1x8x32xf32, #tpu.memory_space<vmem>>, vector<1x8x32xf32>
    %4 = vector.shape_cast %3 : vector<1x8x32xf32> to vector<8x32xf32>
    %5 = arith.truncf %4 : vector<8x32xf32> to vector<8x32xbf16>
    %c0_3 = arith.constant 0 : index
    %c0_4 = arith.constant 0 : index
    %6 = vector.load %arg4[%c0_3, %c0_4] : memref<32x32xbf16, #tpu.memory_space<vmem>>, vector<32x32xbf16>
    %cst = arith.constant dense<0.000000e+00> : vector<8x32xf32>
    %7 = tpu.matmul %5, %6, %cst {dimension_numbers = #tpu.dot_dimension_numbers<[1], [0], [0], [1], [0, 0, 1, 1], [], []>} : vector<8x32xbf16>, vector<32x32xbf16>, vector<8x32xf32> -> vector<8x32xf32>
    %c0_5 = arith.constant 0 : index
    %c0_6 = arith.constant 0 : index
    %8 = vector.load %arg5[%c0_5, %c0_6] : memref<1x32xf32, #tpu.memory_space<vmem>>, vector<1x32xf32>
    %9 = vector.broadcast %8 : vector<1x32xf32> to vector<8x32xf32>
    %10 = arith.addf %7, %9 : vector<8x32xf32>
    %11 = arith.truncf %10 : vector<8x32xf32> to vector<8x32xbf16>
    %12 = vector.shape_cast %11 : vector<8x32xbf16> to vector<8x4x8xbf16>
    %c0_7 = arith.constant 0 : index
    %c0_8 = arith.constant 0 : index
    %13 = vector.load %arg13[%c0_7, %c0_8] : memref<8x32xbf16, #tpu.memory_space<vmem>>, vector<8x32xbf16>
    %c0_9 = arith.constant 0 : index
    %c0_10 = arith.constant 0 : index
    %14 = vector.load %arg14[%c0_9, %c0_10] : memref<8x32xbf16, #tpu.memory_space<vmem>>, vector<8x32xbf16>
    %15 = vector.shape_cast %13 : vector<8x32xbf16> to vector<8x4x8xbf16>
    %16 = vector.shape_cast %14 : vector<8x32xbf16> to vector<8x4x8xbf16>
    "tpu.trace_start"() <{level = 10 : i32, message = "qhd,khd->qhk"}> : () -> ()
    %cst_11 = arith.constant dense<0.000000e+00> : vector<4x8x8xf32>
    %17 = tpu.matmul %15, %12, %cst_11 {dimension_numbers = #tpu.dot_dimension_numbers<[2], [2], [0], [0], [0, 1, 0, 0, 1, 0], [1], [1]>} : vector<8x4x8xbf16>, vector<8x4x8xbf16>, vector<4x8x8xf32> -> vector<4x8x8xf32>
    %18 = tpu.transpose %17, [2, 0, 1] : vector<4x8x8xf32> -> vector<8x4x8xf32>
    "tpu.trace_stop"() : () -> ()
    %cst_12 = arith.constant dense<0xFF800000> : vector<8x4xf32>
    %19 = vector.multi_reduction <maximumf>, %18, %cst_12 [2] : vector<8x4x8xf32> to vector<8x4xf32>
    %20 = vector.shape_cast %19 : vector<8x4xf32> to vector<8x4x1xf32>
    %21 = vector.broadcast %20 : vector<8x4x1xf32> to vector<8x4x8xf32>
    %22 = arith.subf %18, %21 : vector<8x4x8xf32>
    %23 = math.exp %22 : vector<8x4x8xf32>
    %cst_13 = arith.constant dense<0.000000e+00> : vector<8x4xf32>
    %24 = vector.multi_reduction <add>, %23, %cst_13 [2] : vector<8x4x8xf32> to vector<8x4xf32>
    %25 = vector.shape_cast %24 : vector<8x4xf32> to vector<8x4x1xf32>
    %26 = arith.truncf %23 : vector<8x4x8xf32> to vector<8x4x8xbf16>
    "tpu.trace_start"() <{level = 10 : i32, message = "qhk,khd->qhd"}> : () -> ()
    %cst_14 = arith.constant dense<0.000000e+00> : vector<4x8x8xf32>
    %27 = tpu.matmul %16, %26, %cst_14 {dimension_numbers = #tpu.dot_dimension_numbers<[0], [2], [2], [0], [0, 1, 0, 2, 1, 0], [1], [1]>} : vector<8x4x8xbf16>, vector<8x4x8xbf16>, vector<4x8x8xf32> -> vector<4x8x8xf32>
    %28 = tpu.transpose %27, [2, 0, 1] : vector<4x8x8xf32> -> vector<8x4x8xf32>
    "tpu.trace_stop"() : () -> ()
    %29 = tpu.reciprocal %25 : vector<8x4x1xf32> -> vector<8x4x1xf32>
    %30 = vector.broadcast %29 : vector<8x4x1xf32> to vector<8x4x8xf32>
    %31 = arith.mulf %28, %30 : vector<8x4x8xf32>
    %32 = vector.shape_cast %31 : vector<8x4x8xf32> to vector<8x32xf32>
    %33 = arith.truncf %32 : vector<8x32xf32> to vector<8x32xbf16>
    %c0_15 = arith.constant 0 : index
    %c0_16 = arith.constant 0 : index
    %34 = vector.load %arg8[%c0_15, %c0_16] : memref<32x32xbf16, #tpu.memory_space<vmem>>, vector<32x32xbf16>
    %cst_17 = arith.constant dense<0.000000e+00> : vector<8x32xf32>
    %35 = tpu.matmul %33, %34, %cst_17 {dimension_numbers = #tpu.dot_dimension_numbers<[1], [0], [0], [1], [0, 0, 1, 1], [], []>} : vector<8x32xbf16>, vector<32x32xbf16>, vector<8x32xf32> -> vector<8x32xf32>
    %c0_18 = arith.constant 0 : index
    %c0_19 = arith.constant 0 : index
    %36 = vector.load %arg9[%c0_18, %c0_19] : memref<1x32xf32, #tpu.memory_space<vmem>>, vector<1x32xf32>
    %37 = vector.broadcast %36 : vector<1x32xf32> to vector<8x32xf32>
    %38 = arith.addf %35, %37 : vector<8x32xf32>
    %39 = arith.addf %38, %4 : vector<8x32xf32>
    %cst_20 = arith.constant dense<0.000000e+00> : vector<8xf32>
    %40 = vector.multi_reduction <add>, %39, %cst_20 [1] : vector<8x32xf32> to vector<8xf32>
    %41 = vector.shape_cast %40 : vector<8xf32> to vector<8x1xf32>
    %cst_21 = arith.constant 3.200000e+01 : f32
    %42 = vector.broadcast %cst_21 : f32 to vector<8x1xf32>
    %43 = arith.divf %41, %42 : vector<8x1xf32>
    %44 = vector.broadcast %43 : vector<8x1xf32> to vector<8x32xf32>
    %45 = arith.subf %39, %44 : vector<8x32xf32>
    %46 = arith.mulf %45, %45 : vector<8x32xf32>
    %cst_22 = arith.constant dense<0.000000e+00> : vector<8xf32>
    %47 = vector.multi_reduction <add>, %46, %cst_22 [1] : vector<8x32xf32> to vector<8xf32>
    %48 = vector.shape_cast %47 : vector<8xf32> to vector<8x1xf32>
    %cst_23 = arith.constant 3.200000e+01 : f32
    %49 = vector.broadcast %cst_23 : f32 to vector<8x1xf32>
    %50 = arith.divf %48, %49 : vector<8x1xf32>
    %51 = vector.broadcast %43 : vector<8x1xf32> to vector<8x32xf32>
    %52 = arith.subf %39, %51 : vector<8x32xf32>
    %cst_24 = arith.constant 9.99999996E-13 : f32
    %53 = vector.broadcast %cst_24 : f32 to vector<8x1xf32>
    %54 = arith.addf %50, %53 : vector<8x1xf32>
    %55 = math.rsqrt %54 : vector<8x1xf32>
    %56 = vector.broadcast %55 : vector<8x1xf32> to vector<8x32xf32>
    %57 = arith.mulf %52, %56 : vector<8x32xf32>
    %c0_25 = arith.constant 0 : index
    %c0_26 = arith.constant 0 : index
    %58 = vector.load %arg10[%c0_25, %c0_26] : memref<1x32xf32, #tpu.memory_space<vmem>>, vector<1x32xf32>
    %59 = vector.broadcast %58 : vector<1x32xf32> to vector<8x32xf32>
    %60 = arith.mulf %57, %59 : vector<8x32xf32>
    %c0_27 = arith.constant 0 : index
    %c0_28 = arith.constant 0 : index
    %61 = vector.load %arg11[%c0_27, %c0_28] : memref<1x32xf32, #tpu.memory_space<vmem>>, vector<1x32xf32>
    %62 = vector.broadcast %61 : vector<1x32xf32> to vector<8x32xf32>
    %63 = arith.addf %60, %62 : vector<8x32xf32>
    %c0_29 = arith.constant 0 : index
    %c0_30 = arith.constant 0 : index
    %c0_31 = arith.constant 0 : index
    %64 = vector.load %arg12[%c0_29, %c0_30, %c0_31] : memref<1x8x32xf32, #tpu.memory_space<vmem>>, vector<1x8x32xf32>
    %65 = vector.shape_cast %64 : vector<1x8x32xf32> to vector<8x32xf32>
    %66 = vector.shape_cast %63 : vector<8x32xf32> to vector<1x8x32xf32>
    tpu.vector_store %arg12[%c0_29, %c0_30, %c0_31], %66 {strides = array<i32>} : memref<1x8x32xf32, #tpu.memory_space<vmem>>, vector<1x8x32xf32>,
    return
  }
  func.func @transform_0(%arg0: i32, %arg1: i32) -> (i32, i32, i32) {
    %c0_i32 = arith.constant 0 : i32
    %c0_i32_0 = arith.constant 0 : i32
    %c0_i32_1 = arith.constant 0 : i32
    return %arg0, %c0_i32, %c0_i32_0 : i32, i32, i32
  }
  func.func @transform_1(%arg0: i32, %arg1: i32) -> (i32, i32, i32) {
    %c0_i32 = arith.constant 0 : i32
    %c0_i32_0 = arith.constant 0 : i32
    return %arg0, %arg1, %c0_i32 : i32, i32, i32
  }
  func.func @transform_2(%arg0: i32, %arg1: i32) -> (i32, i32) {
    %c0_i32 = arith.constant 0 : i32
    %c0_i32_0 = arith.constant 0 : i32
    %c0_i32_1 = arith.constant 0 : i32
    return %c0_i32, %c0_i32_0 : i32, i32
  }
  func.func @transform_3(%arg0: i32, %arg1: i32) -> (i32, i32) {
    %c0_i32 = arith.constant 0 : i32
    %c0_i32_0 = arith.constant 0 : i32
    %c0_i32_1 = arith.constant 0 : i32
    return %c0_i32, %c0_i32_0 : i32, i32
  }
  func.func @transform_4(%arg0: i32, %arg1: i32) -> (i32, i32) {
    %c0_i32 = arith.constant 0 : i32
    %c0_i32_0 = arith.constant 0 : i32
    %c0_i32_1 = arith.constant 0 : i32
    return %c0_i32, %c0_i32_0 : i32, i32
  }
  func.func @transform_5(%arg0: i32, %arg1: i32) -> (i32, i32) {
    %c0_i32 = arith.constant 0 : i32
    %c0_i32_0 = arith.constant 0 : i32
    %c0_i32_1 = arith.constant 0 : i32
    return %c0_i32, %c0_i32_0 : i32, i32
  }
  func.func @transform_6(%arg0: i32, %arg1: i32) -> (i32, i32) {
    %c0_i32 = arith.constant 0 : i32
    %c0_i32_0 = arith.constant 0 : i32
    %c0_i32_1 = arith.constant 0 : i32
    return %c0_i32, %c0_i32_0 : i32, i32
  }
  func.func @transform_7(%arg0: i32, %arg1: i32) -> (i32, i32) {
    %c0_i32 = arith.constant 0 : i32
    %c0_i32_0 = arith.constant 0 : i32
    %c0_i32_1 = arith.constant 0 : i32
    return %c0_i32, %c0_i32_0 : i32, i32
  }
  func.func @transform_8(%arg0: i32, %arg1: i32) -> (i32, i32) {
    %c0_i32 = arith.constant 0 : i32
    %c0_i32_0 = arith.constant 0 : i32
    %c0_i32_1 = arith.constant 0 : i32
    return %c0_i32, %c0_i32_0 : i32, i32
  }
  func.func @transform_9(%arg0: i32, %arg1: i32) -> (i32, i32) {
    %c0_i32 = arith.constant 0 : i32
    %c0_i32_0 = arith.constant 0 : i32
    %c0_i32_1 = arith.constant 0 : i32
    return %c0_i32, %c0_i32_0 : i32, i32
  }
  func.func @transform_10(%arg0: i32, %arg1: i32) -> (i32, i32, i32) {
    %c0_i32 = arith.constant 0 : i32
    %c0_i32_0 = arith.constant 0 : i32
    return %arg0, %arg1, %c0_i32 : i32, i32, i32
  }
}

</mosaic_0001>

<llo_original>
// kernel: tpu_custom_call.1
$region0: #{tpu_custom_call.1}
  #allocation0 [shape = 'u32[]', space=smem, size = 0x4, offset = 0x4, fixed_abs, tag = 'smem constant byte address 0x4 - core index']
  #allocation1 [shape = 'u32[72,128]{1,0:T(1,128)}', space=vmem, size = 0x9000, scoped, tag = 'internal scratch']
  #allocation2 [shape = 'bf16[8,32]{1,0:T(8,128)(2,1)}', space=vmem, size = 0x800, scoped, tag = 'scratch operand']
  #allocation3 [shape = 'bf16[8,32]{1,0:T(8,128)(2,1)}', space=vmem, size = 0x800, scoped, tag = 'scratch operand']
  %s0 = inlined_call_operand.hbm [shape: bf16[2,8,32], index: 0, kind: input, shape index: {}]
  %s1 = inlined_call_operand.hbm [shape: f32[2,8,32], index: 1, kind: input, shape index: {}]
  %s2 = inlined_call_operand.hbm [shape: bf16[32,32], index: 2, kind: input, shape index: {}]
  %s3 = inlined_call_operand.vmem [shape: f32[1,32], index: 3, kind: input, shape index: {}]
  %s4 = inlined_call_operand.hbm [shape: bf16[32,64], index: 4, kind: input, shape index: {}]
  %s5 = inlined_call_operand.vmem [shape: f32[1,64], index: 5, kind: input, shape index: {}]
  %s6 = inlined_call_operand.hbm [shape: bf16[32,32], index: 6, kind: input, shape index: {}]
  %s7 = inlined_call_operand.vmem [shape: f32[1,32], index: 7, kind: input, shape index: {}]
  %s8 = inlined_call_operand.vmem [shape: f32[1,32], index: 8, kind: input, shape index: {}]
  %s9 = inlined_call_operand.vmem [shape: f32[1,32], index: 9, kind: input, shape index: {}]
  %s10 = inlined_call_operand.hbm [shape: f32[2,8,32], index: 10, kind: output, shape index: {}]
  %s11 = sld [smem:[#allocation0]]
  $region97: #{tpu_custom_call.1} parent=0
    _
  %s13 = ssub.s32 1, %s11
  %s14 = scalar_select 0, %s13, %s11
  $region1: #{tpu_custom_call.1} parent=0
    #allocation4 [shape = 'u8[4096]{0}', space=vmem, size = 0x1000, scoped, tag = 'input window, operand 0']
    #allocation5 [shape = 's32[2]{0}', space=sflag, size = 0x8, scoped, tag = 'scoped memory for tpu_custom_call.1']
    #allocation6 [shape = 's32[2]{0}', space=sflag, size = 0x8, scoped, tag = 'scoped memory for tpu_custom_call.1']
    #allocation7 [shape = 'u8[8192]{0}', space=vmem, size = 0x2000, scoped, tag = 'input window, operand 1']
    #allocation8 [shape = 's32[2]{0}', space=sflag, size = 0x8, scoped, tag = 'scoped memory for tpu_custom_call.1']
    #allocation9 [shape = 'u8[8192]{0}', space=vmem, size = 0x2000, scoped, tag = 'input window, operand 2, single buffered']
    #allocation10 [shape = 'u8[8192]{0}', space=vmem, size = 0x2000, scoped, tag = 'input window, operand 4, single buffered']
    #allocation11 [shape = 's32[1]{0}', space=sflag, size = 0x4, scoped, tag = 'scoped memory for tpu_custom_call.1']
    #allocation12 [shape = 'u8[8192]{0}', space=vmem, size = 0x2000, scoped, tag = 'input window, operand 6, single buffered']
    #allocation13 [shape = 'u8[8192]{0}', space=vmem, size = 0x2000, scoped, tag = 'output window, operand 0']
    %15 = vsyncpa [#allocation5], 0
    %s16 = scalar_lea.sflag [#allocation5], 1
    %17 = vsyncpa %s16, 0
    %18 = vsyncpa [#allocation8], 0
    %s19 = scalar_lea.sflag [#allocation8], 1
    %20 = vsyncpa %s19, 0
    %21 = vsyncpa [#allocation11], 0
    %22 = vsyncpa [#allocation6], 0
    %s23 = scalar_lea.sflag [#allocation6], 1
    %24 = vsyncpa %s23, 0
    loop: start=0, step=1, limit=4
    $region2: #{tpu_custom_call.1} parent=1 // loop_pre_header
      _
    $region3: #{tpu_custom_call.1} parent=1 // loop_header
      %s26 = sphi 0, %s30
      %p27 = scmp.ge.s32.totalorder %s26, 4
      %s33 = sphi 0, %s45
      %s34 = sphi 0, %s41
      %s35 = sphi 0, %s33
      %s36 = sphi 0, %s34
      %s37 = sphi 0, %s35
      %s38 = sphi 0, %s36
      %s48 = sphi 0, %s50
      %s51 = sphi 0, %s48
      %s52 = sphi 0, %s51
      %s68 = sphi 0, %s52
      %s76 = sphi 0, %s78
      %s79 = sphi 0, %s76
      %s80 = sphi 0, %s79
      %s96 = sphi 0, %s80
      %s100 = sphi 0, %s100
      %s102 = sphi 0, %s100
      %s103 = sphi 0, %s102
      %s117 = sphi 0, %s103
      %s121 = sphi 0, %s121
      %s123 = sphi 0, %s121
      %s124 = sphi 0, %s123
      %s138 = sphi 0, %s124
      %s142 = sphi 0, %s142
      %s144 = sphi 0, %s142
      %s145 = sphi 0, %s144
      %s159 = sphi 0, %s145
      %s163 = sphi 0, %s163
      %s165 = sphi 0, %s163
      %s166 = sphi 0, %s165
      %s180 = sphi 0, %s166
      %s184 = sphi 0, %s184
      %s186 = sphi 0, %s184
      %s187 = sphi 0, %s186
      %s201 = sphi 0, %s187
      %s205 = sphi 0, %s205
      %s207 = sphi 0, %s205
      %s208 = sphi 0, %s207
      %s222 = sphi 0, %s208
      %s226 = sphi 0, %s226
      %s228 = sphi 0, %s226
      %s229 = sphi 0, %s228
      %s243 = sphi 0, %s229
      %s247 = sphi 0, %s247
      %s249 = sphi 0, %s247
      %s250 = sphi 0, %s249
      %s264 = sphi 0, %s250
      %s272 = sphi 0, %s274
      %s275 = sphi 0, %s272
      %s276 = sphi 0, %s275
      %s292 = sphi 0, %s276
    $region4: #{tpu_custom_call.1} parent=1 // loop_header_branch
      %29 = sbr.rel (%p27) target = $region8
    $region5: #{tpu_custom_call.1} parent=1 // loop_body
      %s31 = ssub.s32 %s26, 1
      %s32 = ssub.s32 %s26, 2
      %s39 = sadd.s32 1, %s34
      %p40 = scmp.ge.s32.totalorder %s39, 1
      %s41 = scalar_select %p40, 0, %s39
      %s42 = sadd.s32 1, %s33
      %s43 = scalar_select %p40, %s42, %s33
      %p44 = scmp.ge.s32.totalorder %s43, 2
      %s45 = scalar_select %p44, 0, %s43
      %s46 = ssub.s32 %s33, %s45
      %p47 = scmp.eq.s32.totalorder %s46, 0
      %s49 = sadd.s32 %s48, 1
      %s50 = scalar_select %p47, %s48, %s49
      %p53 = pneg %p47
      %p54 = scmp.eq.s32.totalorder %s26, 1
      %p55 = por %p53, %p54
      %p56 = scmp.ne.s32.totalorder %s48, %s51
      %p57 = scmp.eq.s32.totalorder %s26, 0
      %p58 = por %p56, %p57
      %p59 = scmp.ne.s32.totalorder %s48, %s51
      %p60 = scmp.eq.s32.totalorder %s31, 1
      %p61 = por %p59, %p60
      %p62 = scmp.ne.s32.totalorder %s51, %s52
      %p63 = scmp.eq.s32.totalorder %s31, 0
      %p64 = por %p62, %p63
      %p65 = scmp.ne.s32.totalorder %s51, %s52
      %p66 = scmp.eq.s32.totalorder %s32, 1
      %p67 = por %p65, %p66
      %p69 = scmp.ne.s32.totalorder %s52, %s68
      %p70 = scmp.eq.s32.totalorder %s32, 0
      %p71 = por %p69, %p70
      %s72 = ssub.s32 %s33, %s45
      %s73 = ssub.s32 %s34, %s41
      %s74 = sor.u32 %s72, %s73
      %p75 = scmp.eq.s32.totalorder %s74, 0
      %s77 = sadd.s32 %s76, 1
      %s78 = scalar_select %p75, %s76, %s77
      %p81 = pneg %p75
      %p82 = scmp.eq.s32.totalorder %s26, 1
      %p83 = por %p81, %p82
      %p84 = scmp.ne.s32.totalorder %s76, %s79
      %p85 = scmp.eq.s32.totalorder %s26, 0
      %p86 = por %p84, %p85
      %p87 = scmp.ne.s32.totalorder %s76, %s79
      %p88 = scmp.eq.s32.totalorder %s31, 1
      %p89 = por %p87, %p88
      %p90 = scmp.ne.s32.totalorder %s79, %s80
      %p91 = scmp.eq.s32.totalorder %s31, 0
      %p92 = por %p90, %p91
      %p93 = scmp.ne.s32.totalorder %s79, %s80
      %p94 = scmp.eq.s32.totalorder %s32, 1
      %p95 = por %p93, %p94
      %p97 = scmp.ne.s32.totalorder %s80, %s96
      %p98 = scmp.eq.s32.totalorder %s32, 0
      %p99 = por %p97, %p98
      %s101 = sadd.s32 %s100, 1
      %p104 = scmp.eq.s32.totalorder %s26, 1
      %p105 = scmp.ne.s32.totalorder %s100, %s102
      %p106 = scmp.eq.s32.totalorder %s26, 0
      %p107 = por %p105, %p106
      %p108 = scmp.ne.s32.totalorder %s100, %s102
      %p109 = scmp.eq.s32.totalorder %s31, 1
      %p110 = por %p108, %p109
      %p111 = scmp.ne.s32.totalorder %s102, %s103
      %p112 = scmp.eq.s32.totalorder %s31, 0
      %p113 = por %p111, %p112
      %p114 = scmp.ne.s32.totalorder %s102, %s103
      %p115 = scmp.eq.s32.totalorder %s32, 1
      %p116 = por %p114, %p115
      %p118 = scmp.ne.s32.totalorder %s103, %s117
      %p119 = scmp.eq.s32.totalorder %s32, 0
      %p120 = por %p118, %p119
      %s122 = sadd.s32 %s121, 1
      %p125 = scmp.eq.s32.totalorder %s26, 1
      %p126 = scmp.ne.s32.totalorder %s121, %s123
      %p127 = scmp.eq.s32.totalorder %s26, 0
      %p128 = por %p126, %p127
      %p129 = scmp.ne.s32.totalorder %s121, %s123
      %p130 = scmp.eq.s32.totalorder %s31, 1
      %p131 = por %p129, %p130
      %p132 = scmp.ne.s32.totalorder %s123, %s124
      %p133 = scmp.eq.s32.totalorder %s31, 0
      %p134 = por %p132, %p133
      %p135 = scmp.ne.s32.totalorder %s123, %s124
      %p136 = scmp.eq.s32.totalorder %s32, 1
      %p137 = por %p135, %p136
      %p139 = scmp.ne.s32.totalorder %s124, %s138
      %p140 = scmp.eq.s32.totalorder %s32, 0
      %p141 = por %p139, %p140
      %s143 = sadd.s32 %s142, 1
      %p146 = scmp.eq.s32.totalorder %s26, 1
      %p147 = scmp.ne.s32.totalorder %s142, %s144
      %p148 = scmp.eq.s32.totalorder %s26, 0
      %p149 = por %p147, %p148
      %p150 = scmp.ne.s32.totalorder %s142, %s144
      %p151 = scmp.eq.s32.totalorder %s31, 1
      %p152 = por %p150, %p151
      %p153 = scmp.ne.s32.totalorder %s144, %s145
      %p154 = scmp.eq.s32.totalorder %s31, 0
      %p155 = por %p153, %p154
      %p156 = scmp.ne.s32.totalorder %s144, %s145
      %p157 = scmp.eq.s32.totalorder %s32, 1
      %p158 = por %p156, %p157
      %p160 = scmp.ne.s32.totalorder %s145, %s159
      %p161 = scmp.eq.s32.totalorder %s32, 0
      %p162 = por %p160, %p161
      %s164 = sadd.s32 %s163, 1
      %p167 = scmp.eq.s32.totalorder %s26, 1
      %p168 = scmp.ne.s32.totalorder %s163, %s165
      %p169 = scmp.eq.s32.totalorder %s26, 0
      %p170 = por %p168, %p169
      %p171 = scmp.ne.s32.totalorder %s163, %s165
      %p172 = scmp.eq.s32.totalorder %s31, 1
      %p173 = por %p171, %p172
      %p174 = scmp.ne.s32.totalorder %s165, %s166
      %p175 = scmp.eq.s32.totalorder %s31, 0
      %p176 = por %p174, %p175
      %p177 = scmp.ne.s32.totalorder %s165, %s166
      %p178 = scmp.eq.s32.totalorder %s32, 1
      %p179 = por %p177, %p178
      %p181 = scmp.ne.s32.totalorder %s166, %s180
      %p182 = scmp.eq.s32.totalorder %s32, 0
      %p183 = por %p181, %p182
      %s185 = sadd.s32 %s184, 1
      %p188 = scmp.eq.s32.totalorder %s26, 1
      %p189 = scmp.ne.s32.totalorder %s184, %s186
      %p190 = scmp.eq.s32.totalorder %s26, 0
      %p191 = por %p189, %p190
      %p192 = scmp.ne.s32.totalorder %s184, %s186
      %p193 = scmp.eq.s32.totalorder %s31, 1
      %p194 = por %p192, %p193
      %p195 = scmp.ne.s32.totalorder %s186, %s187
      %p196 = scmp.eq.s32.totalorder %s31, 0
      %p197 = por %p195, %p196
      %p198 = scmp.ne.s32.totalorder %s186, %s187
      %p199 = scmp.eq.s32.totalorder %s32, 1
      %p200 = por %p198, %p199
      %p202 = scmp.ne.s32.totalorder %s187, %s201
      %p203 = scmp.eq.s32.totalorder %s32, 0
      %p204 = por %p202, %p203
      %s206 = sadd.s32 %s205, 1
      %p209 = scmp.eq.s32.totalorder %s26, 1
      %p210 = scmp.ne.s32.totalorder %s205, %s207
      %p211 = scmp.eq.s32.totalorder %s26, 0
      %p212 = por %p210, %p211
      %p213 = scmp.ne.s32.totalorder %s205, %s207
      %p214 = scmp.eq.s32.totalorder %s31, 1
      %p215 = por %p213, %p214
      %p216 = scmp.ne.s32.totalorder %s207, %s208
      %p217 = scmp.eq.s32.totalorder %s31, 0
      %p218 = por %p216, %p217
      %p219 = scmp.ne.s32.totalorder %s207, %s208
      %p220 = scmp.eq.s32.totalorder %s32, 1
      %p221 = por %p219, %p220
      %p223 = scmp.ne.s32.totalorder %s208, %s222
      %p224 = scmp.eq.s32.totalorder %s32, 0
      %p225 = por %p223, %p224
      %s227 = sadd.s32 %s226, 1
      %p230 = scmp.eq.s32.totalorder %s26, 1
      %p231 = scmp.ne.s32.totalorder %s226, %s228
      %p232 = scmp.eq.s32.totalorder %s26, 0
      %p233 = por %p231, %p232
      %p234 = scmp.ne.s32.totalorder %s226, %s228
      %p235 = scmp.eq.s32.totalorder %s31, 1
      %p236 = por %p234, %p235
      %p237 = scmp.ne.s32.totalorder %s228, %s229
      %p238 = scmp.eq.s32.totalorder %s31, 0
      %p239 = por %p237, %p238
      %p240 = scmp.ne.s32.totalorder %s228, %s229
      %p241 = scmp.eq.s32.totalorder %s32, 1
      %p242 = por %p240, %p241
      %p244 = scmp.ne.s32.totalorder %s229, %s243
      %p245 = scmp.eq.s32.totalorder %s32, 0
      %p246 = por %p244, %p245
      %s248 = sadd.s32 %s247, 1
      %p251 = scmp.eq.s32.totalorder %s26, 1
      %p252 = scmp.ne.s32.totalorder %s247, %s249
      %p253 = scmp.eq.s32.totalorder %s26, 0
      %p254 = por %p252, %p253
      %p255 = scmp.ne.s32.totalorder %s247, %s249
      %p256 = scmp.eq.s32.totalorder %s31, 1
      %p257 = por %p255, %p256
      %p258 = scmp.ne.s32.totalorder %s249, %s250
      %p259 = scmp.eq.s32.totalorder %s31, 0
      %p260 = por %p258, %p259
      %p261 = scmp.ne.s32.totalorder %s249, %s250
      %p262 = scmp.eq.s32.totalorder %s32, 1
      %p263 = por %p261, %p262
      %p265 = scmp.ne.s32.totalorder %s250, %s264
      %p266 = scmp.eq.s32.totalorder %s32, 0
      %p267 = por %p265, %p266
      %s268 = ssub.s32 %s33, %s45
      %s269 = ssub.s32 %s34, %s41
      %s270 = sor.u32 %s268, %s269
      %p271 = scmp.eq.s32.totalorder %s270, 0
      %s273 = sadd.s32 %s272, 1
      %s274 = scalar_select %p271, %s272, %s273
      %p277 = pneg %p271
      %p278 = scmp.eq.s32.totalorder %s26, 1
      %p279 = por %p277, %p278
      %p280 = scmp.ne.s32.totalorder %s272, %s275
      %p281 = scmp.eq.s32.totalorder %s26, 0
      %p282 = por %p280, %p281
      %p283 = scmp.ne.s32.totalorder %s272, %s275
      %p284 = scmp.eq.s32.totalorder %s31, 1
      %p285 = por %p283, %p284
      %p286 = scmp.ne.s32.totalorder %s275, %s276
      %p287 = scmp.eq.s32.totalorder %s31, 0
      %p288 = por %p286, %p287
      %p289 = scmp.ne.s32.totalorder %s275, %s276
      %p290 = scmp.eq.s32.totalorder %s32, 1
      %p291 = por %p289, %p290
      %p293 = scmp.ne.s32.totalorder %s276, %s292
      %p294 = scmp.eq.s32.totalorder %s32, 0
      %p295 = por %p293, %p294
      %p296 = scmp.le.s32.totalorder 1, %s26
      %p297 = scmp.lt.s32.totalorder %s26, 3
      %p298 = pnand %p296, %p297
      %p299 = pneg %p298
      // Predicated region
      $region9: #{tpu_custom_call.1} parent=5 // pred_check
        _
      $region10: #{tpu_custom_call.1} parent=5 // pred_check_branch
        %301 = sbr.rel (%p298) target = $region12
      $region11: #{tpu_custom_call.1} parent=5 // pred_region
        %s302 = ssub.s32 %s26, 1
        // Predicated region
        $region13: #{tpu_custom_call.1} parent=11 // pred_check
          %p303 = pneg %p113
        $region14: #{tpu_custom_call.1} parent=11 // pred_check_branch
          %305 = sbr.rel (%p303) target = $region16
        $region15: #{tpu_custom_call.1} parent=11 // pred_region
          %307 = vsyncadd [#allocation8], 0
          %s308 = sshll.u32 %s2, 4
          %s309 = int_to_ptr.hbm [resolvable:$true] %s308
          %s310 = sshll.u32 [#allocation9], 4
          %s311 = int_to_ptr.vmem [resolvable:$true] %s310
          %316 = dma.hbm_to_vmem [thread:$0]  %s309, 256, %s311, [#allocation8], 64, 64, 4
        $region16: #{tpu_custom_call.1} parent=11 // pred_fallthru
          _
        // Predicated region
        $region17: #{tpu_custom_call.1} parent=11 // pred_check
          %p317 = pneg %p134
        $region18: #{tpu_custom_call.1} parent=11 // pred_check_branch
          %319 = sbr.rel (%p317) target = $region20
        $region19: #{tpu_custom_call.1} parent=11 // pred_region
          _
        $region20: #{tpu_custom_call.1} parent=11 // pred_fallthru
          _
        // Predicated region
        $region21: #{tpu_custom_call.1} parent=11 // pred_check
          %p320 = pneg %p155
        $region22: #{tpu_custom_call.1} parent=11 // pred_check_branch
          %322 = sbr.rel (%p320) target = $region24
        $region23: #{tpu_custom_call.1} parent=11 // pred_region
          %324 = vsyncadd [#allocation11], 0
          %s325 = sshll.u32 %s4, 4
          %s326 = int_to_ptr.hbm [resolvable:$true] %s325
          %s327 = sshll.u32 [#allocation10], 4
          %s328 = int_to_ptr.vmem [resolvable:$true] %s327
          %333 = dma.hbm_to_vmem [thread:$0]  %s326, 256, %s328, [#allocation11], 64, 64, 4
        $region24: #{tpu_custom_call.1} parent=11 // pred_fallthru
          _
        // Predicated region
        $region25: #{tpu_custom_call.1} parent=11 // pred_check
          %p334 = pneg %p176
        $region26: #{tpu_custom_call.1} parent=11 // pred_check_branch
          %336 = sbr.rel (%p334) target = $region28
        $region27: #{tpu_custom_call.1} parent=11 // pred_region
          _
        $region28: #{tpu_custom_call.1} parent=11 // pred_fallthru
          _
        // Predicated region
        $region29: #{tpu_custom_call.1} parent=11 // pred_check
          %p337 = pneg %p197
        $region30: #{tpu_custom_call.1} parent=11 // pred_check_branch
          %339 = sbr.rel (%p337) target = $region32
        $region31: #{tpu_custom_call.1} parent=11 // pred_region
          %341 = vsyncadd [#allocation11], 0
          %s342 = sshll.u32 %s6, 4
          %s343 = int_to_ptr.hbm [resolvable:$true] %s342
          %s344 = sshll.u32 [#allocation12], 4
          %s345 = int_to_ptr.vmem [resolvable:$true] %s344
          %350 = dma.hbm_to_vmem [thread:$0]  %s343, 256, %s345, [#allocation11], 64, 64, 4
        $region32: #{tpu_custom_call.1} parent=11 // pred_fallthru
          _
        // Predicated region
        $region33: #{tpu_custom_call.1} parent=11 // pred_check
          %p351 = pneg %p218
        $region34: #{tpu_custom_call.1} parent=11 // pred_check_branch
          %353 = sbr.rel (%p351) target = $region36
        $region35: #{tpu_custom_call.1} parent=11 // pred_region
          _
        $region36: #{tpu_custom_call.1} parent=11 // pred_fallthru
          _
        // Predicated region
        $region37: #{tpu_custom_call.1} parent=11 // pred_check
          %p354 = pneg %p239
        $region38: #{tpu_custom_call.1} parent=11 // pred_check_branch
          %356 = sbr.rel (%p354) target = $region40
        $region39: #{tpu_custom_call.1} parent=11 // pred_region
          _
        $region40: #{tpu_custom_call.1} parent=11 // pred_fallthru
          _
        // Predicated region
        $region41: #{tpu_custom_call.1} parent=11 // pred_check
          %p357 = pneg %p260
        $region42: #{tpu_custom_call.1} parent=11 // pred_check_branch
          %359 = sbr.rel (%p357) target = $region44
        $region43: #{tpu_custom_call.1} parent=11 // pred_region
          _
        $region44: #{tpu_custom_call.1} parent=11 // pred_fallthru
          _
      $region12: #{tpu_custom_call.1} parent=5 // pred_fallthru
        _
      %p360 = scmp.lt.s32.totalorder %s26, 2
      // Predicated region
      $region45: #{tpu_custom_call.1} parent=5 // pred_check
        %p361 = pneg %p360
      $region46: #{tpu_custom_call.1} parent=5 // pred_check_branch
        %363 = sbr.rel (%p361) target = $region48
      $region47: #{tpu_custom_call.1} parent=5 // pred_region
        // Predicated region
        $region49: #{tpu_custom_call.1} parent=47 // pred_check
          %p364 = pneg %p58
        $region50: #{tpu_custom_call.1} parent=47 // pred_check_branch
          %366 = sbr.rel (%p364) target = $region52
        $region51: #{tpu_custom_call.1} parent=47 // pred_region
          %s367 = sand.u32 %s48, 1
          %s368 = scalar_lea.sflag [#allocation5], %s367
          %s369 = sand.u32 %s48, 1
          %s370 = smul.addr %s369, 4
          %s371 = scalar_lea.vmem [#allocation4], %s370
          %373 = vsyncadd %s368, 0
          %s374 = smul.addr %s33, 4
          %s375 = scalar_lea.hbm %s0, %s374
          %s377 = sshll.u32 %s375, 4
          %s378 = int_to_ptr.hbm [resolvable:$true] %s377
          %s379 = sshll.u32 %s371, 4
          %s380 = int_to_ptr.vmem [resolvable:$true] %s379
          %382 = dma.hbm_to_vmem [thread:$0]  %s378, 64, %s380, %s368
        $region52: #{tpu_custom_call.1} parent=47 // pred_fallthru
          _
        // Predicated region
        $region53: #{tpu_custom_call.1} parent=47 // pred_check
          %p383 = pneg %p86
        $region54: #{tpu_custom_call.1} parent=47 // pred_check_branch
          %385 = sbr.rel (%p383) target = $region56
        $region55: #{tpu_custom_call.1} parent=47 // pred_region
          %s386 = sand.u32 %s26, 1
          %s387 = scalar_lea.sflag [#allocation8], %s386
          %s388 = sand.u32 %s76, 1
          %s389 = smul.addr %s388, 8
          %s390 = scalar_lea.vmem [#allocation7], %s389
          %392 = vsyncadd %s387, 0
          %s393 = sadd.s32 %s34, %s33
          %s394 = smul.addr %s393, 8
          %s395 = scalar_lea.hbm %s1, %s394
          %s397 = sshll.u32 %s395, 4
          %s398 = int_to_ptr.hbm [resolvable:$true] %s397
          %s399 = sshll.u32 %s390, 4
          %s400 = int_to_ptr.vmem [resolvable:$true] %s399
          %402 = dma.hbm_to_vmem [thread:$0]  %s398, 128, %s400, %s387
        $region56: #{tpu_custom_call.1} parent=47 // pred_fallthru
          _
      $region48: #{tpu_custom_call.1} parent=5 // pred_fallthru
        _
      %p403 = scmp.le.s32.totalorder 1, %s26
      %p404 = scmp.lt.s32.totalorder %s26, 3
      %p405 = pnand %p403, %p404
      %p406 = pneg %p405
      // Predicated region
      $region57: #{tpu_custom_call.1} parent=5 // pred_check
        _
      $region58: #{tpu_custom_call.1} parent=5 // pred_check_branch
        %408 = sbr.rel (%p405) target = $region60
      $region59: #{tpu_custom_call.1} parent=5 // pred_region
        %s409 = ssub.s32 %s26, 1
        %s410 = sand.u32 %s51, 1
        %s411 = scalar_lea.sflag [#allocation5], %s410
        %s412 = sand.u32 %s51, 1
        %s413 = smul.addr %s412, 4
        %s414 = scalar_lea.vmem [#allocation4], %s413
        // Predicated region
        $region61: #{tpu_custom_call.1} parent=59 // pred_check
          %p415 = pneg %p64
        $region62: #{tpu_custom_call.1} parent=59 // pred_check_branch
          %417 = sbr.rel (%p415) target = $region64
        $region63: #{tpu_custom_call.1} parent=59 // pred_region
          %419 = dma.done %s411, 64
        $region64: #{tpu_custom_call.1} parent=59 // pred_fallthru
          _
        %s420 = sand.u32 %s31, 1
        %s421 = scalar_lea.sflag [#allocation8], %s420
        %s422 = sand.u32 %s79, 1
        %s423 = smul.addr %s422, 8
        %s424 = scalar_lea.vmem [#allocation7], %s423
        // Predicated region
        $region65: #{tpu_custom_call.1} parent=59 // pred_check
          %p425 = pneg %p92
        $region66: #{tpu_custom_call.1} parent=59 // pred_check_branch
          %427 = sbr.rel (%p425) target = $region68
        $region67: #{tpu_custom_call.1} parent=59 // pred_region
          %429 = dma.done %s421, 128
        $region68: #{tpu_custom_call.1} parent=59 // pred_fallthru
          _
        // Predicated region
        $region69: #{tpu_custom_call.1} parent=59 // pred_check
          %p430 = pneg %p113
        $region70: #{tpu_custom_call.1} parent=59 // pred_check_branch
          %432 = sbr.rel (%p430) target = $region72
        $region71: #{tpu_custom_call.1} parent=59 // pred_region
          %434 = dma.done [#allocation8], 256
        $region72: #{tpu_custom_call.1} parent=59 // pred_fallthru
          _
        // Predicated region
        $region73: #{tpu_custom_call.1} parent=59 // pred_check
          %p435 = pneg %p155
        $region74: #{tpu_custom_call.1} parent=59 // pred_check_branch
          %437 = sbr.rel (%p435) target = $region76
        $region75: #{tpu_custom_call.1} parent=59 // pred_region
          %439 = dma.done [#allocation11], 256
        $region76: #{tpu_custom_call.1} parent=59 // pred_fallthru
          _
        // Predicated region
        $region77: #{tpu_custom_call.1} parent=59 // pred_check
          %p440 = pneg %p197
        $region78: #{tpu_custom_call.1} parent=59 // pred_check_branch
          %442 = sbr.rel (%p440) target = $region80
        $region79: #{tpu_custom_call.1} parent=59 // pred_region
          %444 = dma.done [#allocation11], 256
        $region80: #{tpu_custom_call.1} parent=59 // pred_fallthru
          _
        %s445 = sand.u32 %s51, 1
        %s446 = scalar_lea.sflag [#allocation5], %s445
        %s447 = sand.u32 %s51, 1
        %s448 = smul.addr %s447, 4
        %s449 = scalar_lea.vmem [#allocation4], %s448
        %p450 = pneg %p64
        %p451 = pneg %p61
        %s452 = sand.u32 %s31, 1
        %s453 = scalar_lea.sflag [#allocation8], %s452
        %s454 = sand.u32 %s79, 1
        %s455 = smul.addr %s454, 8
        %s456 = scalar_lea.vmem [#allocation7], %s455
        %p457 = pneg %p92
        %p458 = pneg %p89
        %p459 = pneg %p113
        %p460 = pneg %p110
        %p461 = pneg %p134
        %p462 = pneg %p131
        %p463 = pneg %p155
        %p464 = pneg %p152
        %p465 = pneg %p176
        %p466 = pneg %p173
        %p467 = pneg %p197
        %p468 = pneg %p194
        %p469 = pneg %p218
        %p470 = pneg %p215
        %p471 = pneg %p239
        %p472 = pneg %p236
        %p473 = pneg %p260
        %p474 = pneg %p257
        %p475 = pneg %p288
        %p476 = pneg %p285
        %s477 = sand.u32 %s275, 1
        %s478 = scalar_lea.sflag [#allocation6], %s477
        %s479 = sand.u32 %s275, 1
        %s480 = smul.addr %s479, 8
        %s481 = scalar_lea.vmem [#allocation13], %s480
        %p483 = scmp.eq.s32.totalorder %s36, 0
        // Predicated region
        $region81: #{tpu_custom_call.1} parent=59 // pred_check
          %p484 = pneg %p483
        $region82: #{tpu_custom_call.1} parent=59 // pred_check_branch
          %486 = sbr.rel (%p484) target = $region84
        $region83: #{tpu_custom_call.1} parent=59 // pred_region
          %v487 = vld [vmem:[%s414] sm:$0xf]
          %v488 = vld [vmem:[#allocation10] sm:$0xf]
          %v489 = vld [vmem:[#allocation10 + $0x4] sm:$0xf]
          %v490 = vld [vmem:[#allocation10 + $0x8] sm:$0xf]
          %v491 = vld [vmem:[#allocation10 + $0xc] sm:$0xf]
          %v492 = vld [vmem:[%s5] sm:$0x1]
          %v494 = vperm.slane %v492, 0
          %v500 = vunpack.c.l.b16 %v488
          %v501 = vunpack.c.l.b16 %v489
          %v502 = vunpack.c.l.b16 %v490
          %v503 = vunpack.c.l.b16 %v491
          %v504 = vpack.c.b16 %v501, %v500
          %v505 = vpack.c.b16 %v503, %v502
          %vm508 = vcmask 261120
          %v510 = vsel %vm508, %v487, 0
          %512 = vmatpush.bf16.msra.mxu0 0
          %513 = vmatpush.bf16.msra.mxu0 0
          %514 = vmatpush.bf16.msra.mxu0 0
          %515 = vmatpush.bf16.msra.mxu0 0
          %516 = vmatpush.bf16.msra.mxu0 0
          %517 = vmatpush.bf16.msra.mxu0 0
          %518 = vmatpush.bf16.msra.mxu0 %v505
          %519 = vmatpush.bf16.msra.mxu0 %v504
          %520 = vmatmul.bf16.gmra.mxu0 %v510
          %v521 = vpop.f32.mrf.mxu0
          %v522 = vadd.f32 %v494, %v521
          %v523 = vpop.f32.mrf.mxu0
          %524 = vdwg.mxu0
          %v525 = vpack.c.bf16 %v522, %v522
          %vm526 = vcmask 257024
          %527 = vst.msk [vmem:[#allocation2] sm:$0xf] %vm526, %v525
          %529 = vrot.lane.b32.xlu0 %v525, 96
          %v530 = vpop.permute.xlu0 %529
          %532 = vst.msk [vmem:[#allocation3] sm:$0xf] %vm526, %v530
        $region84: #{tpu_custom_call.1} parent=59 // pred_fallthru
          _
        %v533 = vld [vmem:[%s424] sm:$0xff]
        %v534 = vpack.c.bf16 %v533, %v533
        %v535 = vld [vmem:[#allocation9] sm:$0xf]
        %v536 = vld [vmem:[#allocation9 + $0x4] sm:$0xf]
        %v537 = vld [vmem:[#allocation9 + $0x8] sm:$0xf]
        %v538 = vld [vmem:[#allocation9 + $0xc] sm:$0xf]
        %v539 = vld [vmem:[%s3] sm:$0x1]
        %v541 = vperm.slane %v539, 0
        %v547 = vunpack.c.l.b16 %v535
        %v548 = vunpack.c.l.b16 %v536
        %v549 = vunpack.c.l.b16 %v537
        %v550 = vunpack.c.l.b16 %v538
        %v551 = vpack.c.b16 %v548, %v547
        %v552 = vpack.c.b16 %v550, %v549
        %vm555 = vcmask 261120
        %v557 = vsel %vm555, %v534, 0
        %559 = vmatpush.bf16.msra.mxu0 0
        %560 = vmatpush.bf16.msra.mxu0 0
        %561 = vmatpush.bf16.msra.mxu0 0
        %562 = vmatpush.bf16.msra.mxu0 0
        %563 = vmatpush.bf16.msra.mxu0 0
        %564 = vmatpush.bf16.msra.mxu0 0
        %565 = vmatpush.bf16.msra.mxu0 %v552
        %566 = vmatpush.bf16.msra.mxu0 %v551
        %567 = vmatmul.bf16.gmra.mxu0 %v557
        %v568 = vpop.f32.mrf.mxu0
        %v569 = vadd.f32 %v541, %v568
        %v570 = vpop.f32.mrf.mxu0
        %571 = vdwg.mxu0
        %v572 = vpack.c.bf16 %v569, %v569
        %574 = vrot.lane.b32.xlu0 %v572, 120
        %v575 = vpop.permute.xlu0 %574
        %577 = vrot.lane.b32.xlu0 %v572, 112
        %v578 = vpop.permute.xlu0 %577
        %580 = vrot.lane.b32.xlu0 %v572, 104
        %v581 = vpop.permute.xlu0 %580
        %v583 = vld [vmem:[#allocation2] sm:$0xf]
        %v584 = vld [vmem:[#allocation3] sm:$0xf]
        %586 = vrot.lane.b32.xlu0 %v583, 120
        %v587 = vpop.permute.xlu0 %586
        %588 = vrot.lane.b32.xlu0 %v583, 112
        %v589 = vpop.permute.xlu0 %588
        %590 = vrot.lane.b32.xlu0 %v583, 104
        %v591 = vpop.permute.xlu0 %590
        %593 = vrot.lane.b32.xlu0 %v584, 120
        %v594 = vpop.permute.xlu0 %593
        %596 = vrot.lane.b32.xlu0 %v584, 112
        %v597 = vpop.permute.xlu0 %596
        %599 = vrot.lane.b32.xlu0 %v584, 104
        %v600 = vpop.permute.xlu0 %599
        %602 = vxpose.xlu0.c.b16.start [1/8] %v572, 128
        %603 = vxpose.xlu0.c.b16.cont [2/8] 0, 128
        %604 = vxpose.xlu0.c.b16.cont [3/8] 0, 128
        %605 = vxpose.xlu0.c.b16.cont [4/8] 0, 128
        %606 = vxpose.xlu0.c.b16.cont [5/8] 0, 128
        %607 = vxpose.xlu0.c.b16.cont [6/8] 0, 128
        %608 = vxpose.xlu0.c.b16.cont [7/8] 0, 128
        %609 = vxpose.xlu0.c.b16.end [8/8] 0, 128
        %v610 = vpop.trf.xlu0
        %v611 = vpop.trf.xlu0
        %v612 = vpop.trf.xlu0
        %v613 = vpop.trf.xlu0
        %v614 = vpop.trf.xlu0
        %v615 = vpop.trf.xlu0
        %v616 = vpop.trf.xlu0
        %v617 = vpop.trf.xlu0
        %618 = vxpose.xlu0.c.b16.start [1/8] %v575, 128
        %619 = vxpose.xlu0.c.b16.cont [2/8] 0, 128
        %620 = vxpose.xlu0.c.b16.cont [3/8] 0, 128
        %621 = vxpose.xlu0.c.b16.cont [4/8] 0, 128
        %622 = vxpose.xlu0.c.b16.cont [5/8] 0, 128
        %623 = vxpose.xlu0.c.b16.cont [6/8] 0, 128
        %624 = vxpose.xlu0.c.b16.cont [7/8] 0, 128
        %625 = vxpose.xlu0.c.b16.end [8/8] 0, 128
        %v626 = vpop.trf.xlu0
        %v627 = vpop.trf.xlu0
        %v628 = vpop.trf.xlu0
        %v629 = vpop.trf.xlu0
        %v630 = vpop.trf.xlu0
        %v631 = vpop.trf.xlu0
        %v632 = vpop.trf.xlu0
        %v633 = vpop.trf.xlu0
        %634 = vxpose.xlu0.c.b16.start [1/8] %v578, 128
        %635 = vxpose.xlu0.c.b16.cont [2/8] 0, 128
        %636 = vxpose.xlu0.c.b16.cont [3/8] 0, 128
        %637 = vxpose.xlu0.c.b16.cont [4/8] 0, 128
        %638 = vxpose.xlu0.c.b16.cont [5/8] 0, 128
        %639 = vxpose.xlu0.c.b16.cont [6/8] 0, 128
        %640 = vxpose.xlu0.c.b16.cont [7/8] 0, 128
        %641 = vxpose.xlu0.c.b16.end [8/8] 0, 128
        %v642 = vpop.trf.xlu0
        %v643 = vpop.trf.xlu0
        %v644 = vpop.trf.xlu0
        %v645 = vpop.trf.xlu0
        %v646 = vpop.trf.xlu0
        %v647 = vpop.trf.xlu0
        %v648 = vpop.trf.xlu0
        %v649 = vpop.trf.xlu0
        %650 = vxpose.xlu0.c.b16.start [1/8] %v581, 128
        %651 = vxpose.xlu0.c.b16.cont [2/8] 0, 128
        %652 = vxpose.xlu0.c.b16.cont [3/8] 0, 128
        %653 = vxpose.xlu0.c.b16.cont [4/8] 0, 128
        %654 = vxpose.xlu0.c.b16.cont [5/8] 0, 128
        %655 = vxpose.xlu0.c.b16.cont [6/8] 0, 128
        %656 = vxpose.xlu0.c.b16.cont [7/8] 0, 128
        %657 = vxpose.xlu0.c.b16.end [8/8] 0, 128
        %v658 = vpop.trf.xlu0
        %v659 = vpop.trf.xlu0
        %v660 = vpop.trf.xlu0
        %v661 = vpop.trf.xlu0
        %v662 = vpop.trf.xlu0
        %v663 = vpop.trf.xlu0
        %v664 = vpop.trf.xlu0
        %v665 = vpop.trf.xlu0
        %vm666 = vcmask 64512
        %v668 = vsel %vm666, %v583, 0
        %vm670 = vcmask 1043456
        %v672 = vsel %vm670, %v610, 0
        %674 = vmatpush.bf16.msra.mxu0 0
        %675 = vmatpush.bf16.msra.mxu0 0
        %676 = vmatpush.bf16.msra.mxu0 0
        %677 = vmatpush.bf16.msra.mxu0 0
        %678 = vmatpush.bf16.msra.mxu0 0
        %679 = vmatpush.bf16.msra.mxu0 0
        %680 = vmatpush.bf16.msra.mxu0 0
        %681 = vmatpush.bf16.msra.mxu0 %v672
        %682 = vmatmul.bf16.gmra.mxu0 %v668
        %v683 = vpop.f32.mrf.mxu0
        %v684 = vadd.f32 0.0, %v683
        %v685 = vpop.f32.mrf.mxu0
        %686 = vdwg.mxu0
        %v688 = vsel %vm666, %v587, 0
        %v691 = vsel %vm670, %v626, 0
        %693 = vmatpush.bf16.msra.mxu0 0
        %694 = vmatpush.bf16.msra.mxu0 0
        %695 = vmatpush.bf16.msra.mxu0 0
        %696 = vmatpush.bf16.msra.mxu0 0
        %697 = vmatpush.bf16.msra.mxu0 0
        %698 = vmatpush.bf16.msra.mxu0 0
        %699 = vmatpush.bf16.msra.mxu0 0
        %700 = vmatpush.bf16.msra.mxu0 %v691
        %701 = vmatmul.bf16.gmra.mxu0 %v688
        %v702 = vpop.f32.mrf.mxu0
        %v703 = vadd.f32 0.0, %v702
        %v704 = vpop.f32.mrf.mxu0
        %705 = vdwg.mxu0
        %v707 = vsel %vm666, %v589, 0
        %v710 = vsel %vm670, %v642, 0
        %712 = vmatpush.bf16.msra.mxu0 0
        %713 = vmatpush.bf16.msra.mxu0 0
        %714 = vmatpush.bf16.msra.mxu0 0
        %715 = vmatpush.bf16.msra.mxu0 0
        %716 = vmatpush.bf16.msra.mxu0 0
        %717 = vmatpush.bf16.msra.mxu0 0
        %718 = vmatpush.bf16.msra.mxu0 0
        %719 = vmatpush.bf16.msra.mxu0 %v710
        %720 = vmatmul.bf16.gmra.mxu0 %v707
        %v721 = vpop.f32.mrf.mxu0
        %v722 = vadd.f32 0.0, %v721
        %v723 = vpop.f32.mrf.mxu0
        %724 = vdwg.mxu0
        %v726 = vsel %vm666, %v591, 0
        %v729 = vsel %vm670, %v658, 0
        %731 = vmatpush.bf16.msra.mxu0 0
        %732 = vmatpush.bf16.msra.mxu0 0
        %733 = vmatpush.bf16.msra.mxu0 0
        %734 = vmatpush.bf16.msra.mxu0 0
        %735 = vmatpush.bf16.msra.mxu0 0
        %736 = vmatpush.bf16.msra.mxu0 0
        %737 = vmatpush.bf16.msra.mxu0 0
        %738 = vmatpush.bf16.msra.mxu0 %v729
        %739 = vmatmul.bf16.gmra.mxu0 %v726
        %v740 = vpop.f32.mrf.mxu0
        %v741 = vadd.f32 0.0, %v740
        %v742 = vpop.f32.mrf.mxu0
        %743 = vdwg.mxu0
        %744 = vxpose.xlu0.b32.start [1/16] %v684, 128
        %745 = vxpose.xlu0.b32.cont [2/16] 0.0, 128
        %746 = vxpose.xlu0.b32.cont [3/16] 0.0, 128
        %747 = vxpose.xlu0.b32.cont [4/16] 0.0, 128
        %748 = vxpose.xlu0.b32.cont [5/16] 0.0, 128
        %749 = vxpose.xlu0.b32.cont [6/16] 0.0, 128
        %750 = vxpose.xlu0.b32.cont [7/16] 0.0, 128
        %751 = vxpose.xlu0.b32.cont [8/16] 0.0, 128
        %752 = vxpose.xlu0.b32.cont [9/16] 0.0, 128
        %753 = vxpose.xlu0.b32.cont [10/16] 0.0, 128
        %754 = vxpose.xlu0.b32.cont [11/16] 0.0, 128
        %755 = vxpose.xlu0.b32.cont [12/16] 0.0, 128
        %756 = vxpose.xlu0.b32.cont [13/16] 0.0, 128
        %757 = vxpose.xlu0.b32.cont [14/16] 0.0, 128
        %758 = vxpose.xlu0.b32.cont [15/16] 0.0, 128
        %759 = vxpose.xlu0.b32.end [16/16] 0.0, 128
        %v760 = vpop.trf.xlu0
        %v761 = vpop.trf.xlu0
        %v762 = vpop.trf.xlu0
        %v763 = vpop.trf.xlu0
        %v764 = vpop.trf.xlu0
        %v765 = vpop.trf.xlu0
        %v766 = vpop.trf.xlu0
        %v767 = vpop.trf.xlu0
        %v768 = vpop.trf.xlu0
        %v769 = vpop.trf.xlu0
        %v770 = vpop.trf.xlu0
        %v771 = vpop.trf.xlu0
        %v772 = vpop.trf.xlu0
        %v773 = vpop.trf.xlu0
        %v774 = vpop.trf.xlu0
        %v775 = vpop.trf.xlu0
        %776 = vxpose.xlu0.b32.start [1/16] %v703, 128
        %777 = vxpose.xlu0.b32.cont [2/16] 0.0, 128
        %778 = vxpose.xlu0.b32.cont [3/16] 0.0, 128
        %779 = vxpose.xlu0.b32.cont [4/16] 0.0, 128
        %780 = vxpose.xlu0.b32.cont [5/16] 0.0, 128
        %781 = vxpose.xlu0.b32.cont [6/16] 0.0, 128
        %782 = vxpose.xlu0.b32.cont [7/16] 0.0, 128
        %783 = vxpose.xlu0.b32.cont [8/16] 0.0, 128
        %784 = vxpose.xlu0.b32.cont [9/16] 0.0, 128
        %785 = vxpose.xlu0.b32.cont [10/16] 0.0, 128
        %786 = vxpose.xlu0.b32.cont [11/16] 0.0, 128
        %787 = vxpose.xlu0.b32.cont [12/16] 0.0, 128
        %788 = vxpose.xlu0.b32.cont [13/16] 0.0, 128
        %789 = vxpose.xlu0.b32.cont [14/16] 0.0, 128
        %790 = vxpose.xlu0.b32.cont [15/16] 0.0, 128
        %791 = vxpose.xlu0.b32.end [16/16] 0.0, 128
        %v792 = vpop.trf.xlu0
        %v793 = vpop.trf.xlu0
        %v794 = vpop.trf.xlu0
        %v795 = vpop.trf.xlu0
        %v796 = vpop.trf.xlu0
        %v797 = vpop.trf.xlu0
        %v798 = vpop.trf.xlu0
        %v799 = vpop.trf.xlu0
        %v800 = vpop.trf.xlu0
        %v801 = vpop.trf.xlu0
        %v802 = vpop.trf.xlu0
        %v803 = vpop.trf.xlu0
        %v804 = vpop.trf.xlu0
        %v805 = vpop.trf.xlu0
        %v806 = vpop.trf.xlu0
        %v807 = vpop.trf.xlu0
        %808 = vxpose.xlu0.b32.start [1/16] %v722, 128
        %809 = vxpose.xlu0.b32.cont [2/16] 0.0, 128
        %810 = vxpose.xlu0.b32.cont [3/16] 0.0, 128
        %811 = vxpose.xlu0.b32.cont [4/16] 0.0, 128
        %812 = vxpose.xlu0.b32.cont [5/16] 0.0, 128
        %813 = vxpose.xlu0.b32.cont [6/16] 0.0, 128
        %814 = vxpose.xlu0.b32.cont [7/16] 0.0, 128
        %815 = vxpose.xlu0.b32.cont [8/16] 0.0, 128
        %816 = vxpose.xlu0.b32.cont [9/16] 0.0, 128
        %817 = vxpose.xlu0.b32.cont [10/16] 0.0, 128
        %818 = vxpose.xlu0.b32.cont [11/16] 0.0, 128
        %819 = vxpose.xlu0.b32.cont [12/16] 0.0, 128
        %820 = vxpose.xlu0.b32.cont [13/16] 0.0, 128
        %821 = vxpose.xlu0.b32.cont [14/16] 0.0, 128
        %822 = vxpose.xlu0.b32.cont [15/16] 0.0, 128
        %823 = vxpose.xlu0.b32.end [16/16] 0.0, 128
        %v824 = vpop.trf.xlu0
        %v825 = vpop.trf.xlu0
        %v826 = vpop.trf.xlu0
        %v827 = vpop.trf.xlu0
        %v828 = vpop.trf.xlu0
        %v829 = vpop.trf.xlu0
        %v830 = vpop.trf.xlu0
        %v831 = vpop.trf.xlu0
        %v832 = vpop.trf.xlu0
        %v833 = vpop.trf.xlu0
        %v834 = vpop.trf.xlu0
        %v835 = vpop.trf.xlu0
        %v836 = vpop.trf.xlu0
        %v837 = vpop.trf.xlu0
        %v838 = vpop.trf.xlu0
        %v839 = vpop.trf.xlu0
        %840 = vxpose.xlu0.b32.start [1/16] %v741, 128
        %841 = vxpose.xlu0.b32.cont [2/16] 0.0, 128
        %842 = vxpose.xlu0.b32.cont [3/16] 0.0, 128
        %843 = vxpose.xlu0.b32.cont [4/16] 0.0, 128
        %844 = vxpose.xlu0.b32.cont [5/16] 0.0, 128
        %845 = vxpose.xlu0.b32.cont [6/16] 0.0, 128
        %846 = vxpose.xlu0.b32.cont [7/16] 0.0, 128
        %847 = vxpose.xlu0.b32.cont [8/16] 0.0, 128
        %848 = vxpose.xlu0.b32.cont [9/16] 0.0, 128
        %849 = vxpose.xlu0.b32.cont [10/16] 0.0, 128
        %850 = vxpose.xlu0.b32.cont [11/16] 0.0, 128
        %851 = vxpose.xlu0.b32.cont [12/16] 0.0, 128
        %852 = vxpose.xlu0.b32.cont [13/16] 0.0, 128
        %853 = vxpose.xlu0.b32.cont [14/16] 0.0, 128
        %854 = vxpose.xlu0.b32.cont [15/16] 0.0, 128
        %855 = vxpose.xlu0.b32.end [16/16] 0.0, 128
        %v856 = vpop.trf.xlu0
        %v857 = vpop.trf.xlu0
        %v858 = vpop.trf.xlu0
        %v859 = vpop.trf.xlu0
        %v860 = vpop.trf.xlu0
        %v861 = vpop.trf.xlu0
        %v862 = vpop.trf.xlu0
        %v863 = vpop.trf.xlu0
        %v864 = vpop.trf.xlu0
        %v865 = vpop.trf.xlu0
        %v866 = vpop.trf.xlu0
        %v867 = vpop.trf.xlu0
        %v868 = vpop.trf.xlu0
        %v869 = vpop.trf.xlu0
        %v870 = vpop.trf.xlu0
        %v871 = vpop.trf.xlu0
        %v872 = vrot.slane %v824, 4
        %vm873 = vcmask 1047556
        %v874 = vsel %vm873, %v872, %v760
        %v875 = vrot.slane %v760, 4
        %v876 = vsel %vm873, %v824, %v875
        %v878 = vunpack.c.l.s4 1983009808
        %v879 = vunpack.c.0.s8 %v878
        %v880 = vperm.slane %v874, %v879
        %v882 = vunpack.c.l.s4 1983009808
        %v883 = vunpack.c.0.s8 %v882
        %v884 = vperm.slane %v876, %v883
        %v885 = vrot.slane %v856, 4
        %v886 = vsel %vm873, %v885, %v792
        %v887 = vrot.slane %v792, 4
        %v888 = vsel %vm873, %v856, %v887
        %v890 = vunpack.c.l.s4 1983009808
        %v891 = vunpack.c.0.s8 %v890
        %v892 = vperm.slane %v886, %v891
        %v894 = vunpack.c.l.s4 1983009808
        %v895 = vunpack.c.0.s8 %v894
        %v896 = vperm.slane %v888, %v895
        %v897 = vrot.slane %v892, 4
        %v898 = vsel %vm873, %v897, %v880
        %v899 = vrot.slane %v880, 4
        %v900 = vsel %vm873, %v892, %v899
        %v902 = vunpack.c.l.s4 1934713408
        %v903 = vunpack.c.0.s8 %v902
        %v904 = vperm.slane %v898, %v903
        %v906 = vunpack.c.l.s4 1934713408
        %v907 = vunpack.c.0.s8 %v906
        %v908 = vperm.slane %v900, %v907
        %v909 = vrot.slane %v896, 4
        %v910 = vsel %vm873, %v909, %v884
        %v911 = vrot.slane %v884, 4
        %v912 = vsel %vm873, %v896, %v911
        %v914 = vunpack.c.l.s4 1934713408
        %v915 = vunpack.c.0.s8 %v914
        %v916 = vperm.slane %v910, %v915
        %v918 = vunpack.c.l.s4 1934713408
        %v919 = vunpack.c.0.s8 %v918
        %v920 = vperm.slane %v912, %v919
        %v921 = vrot.slane %v904, 4
        %v922 = vsel %vm873, 0.0, %v921
        %v923 = vrot.slane %v908, 4
        %v924 = vsel %vm873, 0.0, %v923
        %v925 = vrot.slane %v916, 4
        %v926 = vsel %vm873, 0.0, %v925
        %v927 = vrot.slane %v920, 4
        %v928 = vsel %vm873, 0.0, %v927
        %vm929 = vcmask 60416
        %v930 = vsel %vm929, %v904, -inf
        %931 = vmax.xlane.f32.xlu0 %v930
        %v932 = vpop.xlane.xlu0 %931
        %v933 = vsel %vm929, %v922, -inf
        %934 = vmax.xlane.f32.xlu0 %v933
        %v935 = vpop.xlane.xlu0 %934
        %v936 = vsel %vm929, %v908, -inf
        %937 = vmax.xlane.f32.xlu0 %v936
        %v938 = vpop.xlane.xlu0 %937
        %v939 = vsel %vm929, %v924, -inf
        %940 = vmax.xlane.f32.xlu0 %v939
        %v941 = vpop.xlane.xlu0 %940
        %v942 = vsel %vm929, %v916, -inf
        %943 = vmax.xlane.f32.xlu0 %v942
        %v944 = vpop.xlane.xlu0 %943
        %v945 = vsel %vm929, %v926, -inf
        %946 = vmax.xlane.f32.xlu0 %v945
        %v947 = vpop.xlane.xlu0 %946
        %v948 = vsel %vm929, %v920, -inf
        %949 = vmax.xlane.f32.xlu0 %v948
        %v950 = vpop.xlane.xlu0 %949
        %v951 = vsel %vm929, %v928, -inf
        %952 = vmax.xlane.f32.xlu0 %v951
        %v953 = vpop.xlane.xlu0 %952
        %v954 = vsub.f32 %v904, %v932
        %v955 = vsub.f32 %v922, %v935
        %v956 = vsub.f32 %v908, %v938
        %v957 = vsub.f32 %v924, %v941
        %v958 = vsub.f32 %v916, %v944
        %v959 = vsub.f32 %v926, %v947
        %v960 = vsub.f32 %v920, %v950
        %v961 = vsub.f32 %v928, %v953
        %v962 = vmul.f32 %v954, 1.442695
        %v963 = vpow.pop %v962
        %v964 = vmul.f32 %v955, 1.442695
        %v965 = vpow.pop %v964
        %v966 = vmul.f32 %v956, 1.442695
        %v967 = vpow.pop %v966
        %v968 = vmul.f32 %v957, 1.442695
        %v969 = vpow.pop %v968
        %v970 = vmul.f32 %v958, 1.442695
        %v971 = vpow.pop %v970
        %v972 = vmul.f32 %v959, 1.442695
        %v973 = vpow.pop %v972
        %v974 = vmul.f32 %v960, 1.442695
        %v975 = vpow.pop %v974
        %v976 = vmul.f32 %v961, 1.442695
        %v977 = vpow.pop %v976
        %v978 = vsel %vm929, %v963, 0.0
        %979 = vadd.xlane.f32.xlu0 %v978
        %v980 = vpop.xlane.xlu0 %979
        %v981 = vsel %vm929, %v965, 0.0
        %982 = vadd.xlane.f32.xlu0 %v981
        %v983 = vpop.xlane.xlu0 %982
        %v984 = vsel %vm929, %v967, 0.0
        %985 = vadd.xlane.f32.xlu0 %v984
        %v986 = vpop.xlane.xlu0 %985
        %v987 = vsel %vm929, %v969, 0.0
        %988 = vadd.xlane.f32.xlu0 %v987
        %v989 = vpop.xlane.xlu0 %988
        %v990 = vsel %vm929, %v971, 0.0
        %991 = vadd.xlane.f32.xlu0 %v990
        %v992 = vpop.xlane.xlu0 %991
        %v993 = vsel %vm929, %v973, 0.0
        %994 = vadd.xlane.f32.xlu0 %v993
        %v995 = vpop.xlane.xlu0 %994
        %v996 = vsel %vm929, %v975, 0.0
        %997 = vadd.xlane.f32.xlu0 %v996
        %v998 = vpop.xlane.xlu0 %997
        %v999 = vsel %vm929, %v977, 0.0
        %1000 = vadd.xlane.f32.xlu0 %v999
        %v1001 = vpop.xlane.xlu0 %1000
        %v1002 = vpack.c.bf16 %v963, %v963
        %v1003 = vpack.c.bf16 %v965, %v965
        %v1004 = vpack.c.bf16 %v967, %v967
        %v1005 = vpack.c.bf16 %v969, %v969
        %v1006 = vpack.c.bf16 %v971, %v971
        %v1007 = vpack.c.bf16 %v973, %v973
        %v1008 = vpack.c.bf16 %v975, %v975
        %v1009 = vpack.c.bf16 %v977, %v977
        %1010 = vxpose.xlu0.c.b16.start [1/8] %v584, 128
        %1011 = vxpose.xlu0.c.b16.cont [2/8] 0, 128
        %1012 = vxpose.xlu0.c.b16.cont [3/8] 0, 128
        %1013 = vxpose.xlu0.c.b16.cont [4/8] 0, 128
        %1014 = vxpose.xlu0.c.b16.cont [5/8] 0, 128
        %1015 = vxpose.xlu0.c.b16.cont [6/8] 0, 128
        %1016 = vxpose.xlu0.c.b16.cont [7/8] 0, 128
        %1017 = vxpose.xlu0.c.b16.end [8/8] 0, 128
        %v1018 = vpop.trf.xlu0
        %v1019 = vpop.trf.xlu0
        %v1020 = vpop.trf.xlu0
        %v1021 = vpop.trf.xlu0
        %v1022 = vpop.trf.xlu0
        %v1023 = vpop.trf.xlu0
        %v1024 = vpop.trf.xlu0
        %v1025 = vpop.trf.xlu0
        %1026 = vxpose.xlu0.c.b16.start [1/8] %v594, 128
        %1027 = vxpose.xlu0.c.b16.cont [2/8] 0, 128
        %1028 = vxpose.xlu0.c.b16.cont [3/8] 0, 128
        %1029 = vxpose.xlu0.c.b16.cont [4/8] 0, 128
        %1030 = vxpose.xlu0.c.b16.cont [5/8] 0, 128
        %1031 = vxpose.xlu0.c.b16.cont [6/8] 0, 128
        %1032 = vxpose.xlu0.c.b16.cont [7/8] 0, 128
        %1033 = vxpose.xlu0.c.b16.end [8/8] 0, 128
        %v1034 = vpop.trf.xlu0
        %v1035 = vpop.trf.xlu0
        %v1036 = vpop.trf.xlu0
        %v1037 = vpop.trf.xlu0
        %v1038 = vpop.trf.xlu0
        %v1039 = vpop.trf.xlu0
        %v1040 = vpop.trf.xlu0
        %v1041 = vpop.trf.xlu0
        %1042 = vxpose.xlu0.c.b16.start [1/8] %v597, 128
        %1043 = vxpose.xlu0.c.b16.cont [2/8] 0, 128
        %1044 = vxpose.xlu0.c.b16.cont [3/8] 0, 128
        %1045 = vxpose.xlu0.c.b16.cont [4/8] 0, 128
        %1046 = vxpose.xlu0.c.b16.cont [5/8] 0, 128
        %1047 = vxpose.xlu0.c.b16.cont [6/8] 0, 128
        %1048 = vxpose.xlu0.c.b16.cont [7/8] 0, 128
        %1049 = vxpose.xlu0.c.b16.end [8/8] 0, 128
        %v1050 = vpop.trf.xlu0
        %v1051 = vpop.trf.xlu0
        %v1052 = vpop.trf.xlu0
        %v1053 = vpop.trf.xlu0
        %v1054 = vpop.trf.xlu0
        %v1055 = vpop.trf.xlu0
        %v1056 = vpop.trf.xlu0
        %v1057 = vpop.trf.xlu0
        %1058 = vxpose.xlu0.c.b16.start [1/8] %v600, 128
        %1059 = vxpose.xlu0.c.b16.cont [2/8] 0, 128
        %1060 = vxpose.xlu0.c.b16.cont [3/8] 0, 128
        %1061 = vxpose.xlu0.c.b16.cont [4/8] 0, 128
        %1062 = vxpose.xlu0.c.b16.cont [5/8] 0, 128
        %1063 = vxpose.xlu0.c.b16.cont [6/8] 0, 128
        %1064 = vxpose.xlu0.c.b16.cont [7/8] 0, 128
        %1065 = vxpose.xlu0.c.b16.end [8/8] 0, 128
        %v1066 = vpop.trf.xlu0
        %v1067 = vpop.trf.xlu0
        %v1068 = vpop.trf.xlu0
        %v1069 = vpop.trf.xlu0
        %v1070 = vpop.trf.xlu0
        %v1071 = vpop.trf.xlu0
        %v1072 = vpop.trf.xlu0
        %v1073 = vpop.trf.xlu0
        %1074 = vxpose.xlu0.c.b16.start [1/8] %v1002, 128
        %1075 = vxpose.xlu0.c.b16.cont [2/8] 0, 128
        %1076 = vxpose.xlu0.c.b16.cont [3/8] 0, 128
        %1077 = vxpose.xlu0.c.b16.cont [4/8] 0, 128
        %1078 = vxpose.xlu0.c.b16.cont [5/8] 0, 128
        %1079 = vxpose.xlu0.c.b16.cont [6/8] 0, 128
        %1080 = vxpose.xlu0.c.b16.cont [7/8] 0, 128
        %1081 = vxpose.xlu0.c.b16.end [8/8] 0, 128
        %v1082 = vpop.trf.xlu0
        %v1083 = vpop.trf.xlu0
        %v1084 = vpop.trf.xlu0
        %v1085 = vpop.trf.xlu0
        %v1086 = vpop.trf.xlu0
        %v1087 = vpop.trf.xlu0
        %v1088 = vpop.trf.xlu0
        %v1089 = vpop.trf.xlu0
        %1090 = vxpose.xlu0.c.b16.start [1/8] %v1003, 128
        %1091 = vxpose.xlu0.c.b16.cont [2/8] 0, 128
        %1092 = vxpose.xlu0.c.b16.cont [3/8] 0, 128
        %1093 = vxpose.xlu0.c.b16.cont [4/8] 0, 128
        %1094 = vxpose.xlu0.c.b16.cont [5/8] 0, 128
        %1095 = vxpose.xlu0.c.b16.cont [6/8] 0, 128
        %1096 = vxpose.xlu0.c.b16.cont [7/8] 0, 128
        %1097 = vxpose.xlu0.c.b16.end [8/8] 0, 128
        %v1098 = vpop.trf.xlu0
        %v1099 = vpop.trf.xlu0
        %v1100 = vpop.trf.xlu0
        %v1101 = vpop.trf.xlu0
        %v1102 = vpop.trf.xlu0
        %v1103 = vpop.trf.xlu0
        %v1104 = vpop.trf.xlu0
        %v1105 = vpop.trf.xlu0
        %1106 = vxpose.xlu0.c.b16.start [1/8] %v1004, 128
        %1107 = vxpose.xlu0.c.b16.cont [2/8] 0, 128
        %1108 = vxpose.xlu0.c.b16.cont [3/8] 0, 128
        %1109 = vxpose.xlu0.c.b16.cont [4/8] 0, 128
        %1110 = vxpose.xlu0.c.b16.cont [5/8] 0, 128
        %1111 = vxpose.xlu0.c.b16.cont [6/8] 0, 128
        %1112 = vxpose.xlu0.c.b16.cont [7/8] 0, 128
        %1113 = vxpose.xlu0.c.b16.end [8/8] 0, 128
        %v1114 = vpop.trf.xlu0
        %v1115 = vpop.trf.xlu0
        %v1116 = vpop.trf.xlu0
        %v1117 = vpop.trf.xlu0
        %v1118 = vpop.trf.xlu0
        %v1119 = vpop.trf.xlu0
        %v1120 = vpop.trf.xlu0
        %v1121 = vpop.trf.xlu0
        %1122 = vxpose.xlu0.c.b16.start [1/8] %v1005, 128
        %1123 = vxpose.xlu0.c.b16.cont [2/8] 0, 128
        %1124 = vxpose.xlu0.c.b16.cont [3/8] 0, 128
        %1125 = vxpose.xlu0.c.b16.cont [4/8] 0, 128
        %1126 = vxpose.xlu0.c.b16.cont [5/8] 0, 128
        %1127 = vxpose.xlu0.c.b16.cont [6/8] 0, 128
        %1128 = vxpose.xlu0.c.b16.cont [7/8] 0, 128
        %1129 = vxpose.xlu0.c.b16.end [8/8] 0, 128
        %v1130 = vpop.trf.xlu0
        %v1131 = vpop.trf.xlu0
        %v1132 = vpop.trf.xlu0
        %v1133 = vpop.trf.xlu0
        %v1134 = vpop.trf.xlu0
        %v1135 = vpop.trf.xlu0
        %v1136 = vpop.trf.xlu0
        %v1137 = vpop.trf.xlu0
        %1138 = vxpose.xlu0.c.b16.start [1/8] %v1006, 128
        %1139 = vxpose.xlu0.c.b16.cont [2/8] 0, 128
        %1140 = vxpose.xlu0.c.b16.cont [3/8] 0, 128
        %1141 = vxpose.xlu0.c.b16.cont [4/8] 0, 128
        %1142 = vxpose.xlu0.c.b16.cont [5/8] 0, 128
        %1143 = vxpose.xlu0.c.b16.cont [6/8] 0, 128
        %1144 = vxpose.xlu0.c.b16.cont [7/8] 0, 128
        %1145 = vxpose.xlu0.c.b16.end [8/8] 0, 128
        %v1146 = vpop.trf.xlu0
        %v1147 = vpop.trf.xlu0
        %v1148 = vpop.trf.xlu0
        %v1149 = vpop.trf.xlu0
        %v1150 = vpop.trf.xlu0
        %v1151 = vpop.trf.xlu0
        %v1152 = vpop.trf.xlu0
        %v1153 = vpop.trf.xlu0
        %1154 = vxpose.xlu0.c.b16.start [1/8] %v1007, 128
        %1155 = vxpose.xlu0.c.b16.cont [2/8] 0, 128
        %1156 = vxpose.xlu0.c.b16.cont [3/8] 0, 128
        %1157 = vxpose.xlu0.c.b16.cont [4/8] 0, 128
        %1158 = vxpose.xlu0.c.b16.cont [5/8] 0, 128
        %1159 = vxpose.xlu0.c.b16.cont [6/8] 0, 128
        %1160 = vxpose.xlu0.c.b16.cont [7/8] 0, 128
        %1161 = vxpose.xlu0.c.b16.end [8/8] 0, 128
        %v1162 = vpop.trf.xlu0
        %v1163 = vpop.trf.xlu0
        %v1164 = vpop.trf.xlu0
        %v1165 = vpop.trf.xlu0
        %v1166 = vpop.trf.xlu0
        %v1167 = vpop.trf.xlu0
        %v1168 = vpop.trf.xlu0
        %v1169 = vpop.trf.xlu0
        %1170 = vxpose.xlu0.c.b16.start [1/8] %v1008, 128
        %1171 = vxpose.xlu0.c.b16.cont [2/8] 0, 128
        %1172 = vxpose.xlu0.c.b16.cont [3/8] 0, 128
        %1173 = vxpose.xlu0.c.b16.cont [4/8] 0, 128
        %1174 = vxpose.xlu0.c.b16.cont [5/8] 0, 128
        %1175 = vxpose.xlu0.c.b16.cont [6/8] 0, 128
        %1176 = vxpose.xlu0.c.b16.cont [7/8] 0, 128
        %1177 = vxpose.xlu0.c.b16.end [8/8] 0, 128
        %v1178 = vpop.trf.xlu0
        %v1179 = vpop.trf.xlu0
        %v1180 = vpop.trf.xlu0
        %v1181 = vpop.trf.xlu0
        %v1182 = vpop.trf.xlu0
        %v1183 = vpop.trf.xlu0
        %v1184 = vpop.trf.xlu0
        %v1185 = vpop.trf.xlu0
        %1186 = vxpose.xlu0.c.b16.start [1/8] %v1009, 128
        %1187 = vxpose.xlu0.c.b16.cont [2/8] 0, 128
        %1188 = vxpose.xlu0.c.b16.cont [3/8] 0, 128
        %1189 = vxpose.xlu0.c.b16.cont [4/8] 0, 128
        %1190 = vxpose.xlu0.c.b16.cont [5/8] 0, 128
        %1191 = vxpose.xlu0.c.b16.cont [6/8] 0, 128
        %1192 = vxpose.xlu0.c.b16.cont [7/8] 0, 128
        %1193 = vxpose.xlu0.c.b16.end [8/8] 0, 128
        %v1194 = vpop.trf.xlu0
        %v1195 = vpop.trf.xlu0
        %v1196 = vpop.trf.xlu0
        %v1197 = vpop.trf.xlu0
        %v1198 = vpop.trf.xlu0
        %v1199 = vpop.trf.xlu0
        %v1200 = vpop.trf.xlu0
        %v1201 = vpop.trf.xlu0
        %v1202 = vrot.slane %v1146, 4
        %vm1203 = vcmask 1047556
        %v1204 = vsel %vm1203, %v1202, %v1082
        %v1206 = vunpack.c.l.s4 1983009808
        %v1207 = vunpack.c.0.s8 %v1206
        %v1208 = vperm.slane %v1204, %v1207
        %v1209 = vrot.slane %v1178, 4
        %v1210 = vsel %vm1203, %v1209, %v1114
        %v1212 = vunpack.c.l.s4 1983009808
        %v1213 = vunpack.c.0.s8 %v1212
        %v1214 = vperm.slane %v1210, %v1213
        %v1215 = vrot.slane %v1214, 4
        %v1216 = vsel %vm1203, %v1215, %v1208
        %v1217 = vrot.slane %v1208, 4
        %v1218 = vsel %vm1203, %v1214, %v1217
        %v1220 = vunpack.c.l.s4 1934713408
        %v1221 = vunpack.c.0.s8 %v1220
        %v1222 = vperm.slane %v1216, %v1221
        %v1224 = vunpack.c.l.s4 1934713408
        %v1225 = vunpack.c.0.s8 %v1224
        %v1226 = vperm.slane %v1218, %v1225
        %v1227 = vrot.slane %v1222, 4
        %v1228 = vsel %vm1203, 0, %v1227
        %v1229 = vrot.slane %v1226, 4
        %v1230 = vsel %vm1203, 0, %v1229
        %v1231 = vrot.slane %v1162, 4
        %v1232 = vsel %vm1203, %v1231, %v1098
        %v1234 = vunpack.c.l.s4 1983009808
        %v1235 = vunpack.c.0.s8 %v1234
        %v1236 = vperm.slane %v1232, %v1235
        %v1237 = vrot.slane %v1194, 4
        %v1238 = vsel %vm1203, %v1237, %v1130
        %v1240 = vunpack.c.l.s4 1983009808
        %v1241 = vunpack.c.0.s8 %v1240
        %v1242 = vperm.slane %v1238, %v1241
        %v1243 = vrot.slane %v1242, 4
        %v1244 = vsel %vm1203, %v1243, %v1236
        %v1245 = vrot.slane %v1236, 4
        %v1246 = vsel %vm1203, %v1242, %v1245
        %v1248 = vunpack.c.l.s4 1934713408
        %v1249 = vunpack.c.0.s8 %v1248
        %v1250 = vperm.slane %v1244, %v1249
        %v1252 = vunpack.c.l.s4 1934713408
        %v1253 = vunpack.c.0.s8 %v1252
        %v1254 = vperm.slane %v1246, %v1253
        %v1255 = vrot.slane %v1250, 4
        %v1256 = vsel %vm1203, 0, %v1255
        %v1257 = vrot.slane %v1254, 4
        %v1258 = vsel %vm1203, 0, %v1257
        %v1261 = vpack.i.b16 %v1250, %v1222
        %v1263 = vshrl.u32 %v1222, 16
        %v1264 = vshrl.u32 %v1250, 16
        %v1265 = vpack.i.b16 %v1264, %v1263
        %v1269 = vpack.i.b16 %v1256, %v1228
        %v1271 = vshrl.u32 %v1228, 16
        %v1272 = vshrl.u32 %v1256, 16
        %v1273 = vpack.i.b16 %v1272, %v1271
        %v1277 = vpack.i.b16 %v1254, %v1226
        %v1279 = vshrl.u32 %v1226, 16
        %v1280 = vshrl.u32 %v1254, 16
        %v1281 = vpack.i.b16 %v1280, %v1279
        %v1285 = vpack.i.b16 %v1258, %v1230
        %v1287 = vshrl.u32 %v1230, 16
        %v1288 = vshrl.u32 %v1258, 16
        %v1289 = vpack.i.b16 %v1288, %v1287
        %1291 = vxpose.xlu0.c.b16.start [1/8] %v1261, 128
        %1292 = vxpose.xlu0.c.b16.cont [2/8] 0, 128
        %1293 = vxpose.xlu0.c.b16.cont [3/8] 0, 128
        %1294 = vxpose.xlu0.c.b16.cont [4/8] 0, 128
        %1295 = vxpose.xlu0.c.b16.cont [5/8] 0, 128
        %1296 = vxpose.xlu0.c.b16.cont [6/8] 0, 128
        %1297 = vxpose.xlu0.c.b16.cont [7/8] 0, 128
        %1298 = vxpose.xlu0.c.b16.end [8/8] 0, 128
        %v1299 = vpop.trf.xlu0
        %v1300 = vpop.trf.xlu0
        %v1301 = vpop.trf.xlu0
        %v1302 = vpop.trf.xlu0
        %v1303 = vpop.trf.xlu0
        %v1304 = vpop.trf.xlu0
        %v1305 = vpop.trf.xlu0
        %v1306 = vpop.trf.xlu0
        %1307 = vxpose.xlu0.c.b16.start [1/8] %v1265, 128
        %1308 = vxpose.xlu0.c.b16.cont [2/8] 0, 128
        %1309 = vxpose.xlu0.c.b16.cont [3/8] 0, 128
        %1310 = vxpose.xlu0.c.b16.cont [4/8] 0, 128
        %1311 = vxpose.xlu0.c.b16.cont [5/8] 0, 128
        %1312 = vxpose.xlu0.c.b16.cont [6/8] 0, 128
        %1313 = vxpose.xlu0.c.b16.cont [7/8] 0, 128
        %1314 = vxpose.xlu0.c.b16.end [8/8] 0, 128
        %v1315 = vpop.trf.xlu0
        %v1316 = vpop.trf.xlu0
        %v1317 = vpop.trf.xlu0
        %v1318 = vpop.trf.xlu0
        %v1319 = vpop.trf.xlu0
        %v1320 = vpop.trf.xlu0
        %v1321 = vpop.trf.xlu0
        %v1322 = vpop.trf.xlu0
        %1323 = vxpose.xlu0.c.b16.start [1/8] %v1269, 128
        %1324 = vxpose.xlu0.c.b16.cont [2/8] 0, 128
        %1325 = vxpose.xlu0.c.b16.cont [3/8] 0, 128
        %1326 = vxpose.xlu0.c.b16.cont [4/8] 0, 128
        %1327 = vxpose.xlu0.c.b16.cont [5/8] 0, 128
        %1328 = vxpose.xlu0.c.b16.cont [6/8] 0, 128
        %1329 = vxpose.xlu0.c.b16.cont [7/8] 0, 128
        %1330 = vxpose.xlu0.c.b16.end [8/8] 0, 128
        %v1331 = vpop.trf.xlu0
        %v1332 = vpop.trf.xlu0
        %v1333 = vpop.trf.xlu0
        %v1334 = vpop.trf.xlu0
        %v1335 = vpop.trf.xlu0
        %v1336 = vpop.trf.xlu0
        %v1337 = vpop.trf.xlu0
        %v1338 = vpop.trf.xlu0
        %1339 = vxpose.xlu0.c.b16.start [1/8] %v1273, 128
        %1340 = vxpose.xlu0.c.b16.cont [2/8] 0, 128
        %1341 = vxpose.xlu0.c.b16.cont [3/8] 0, 128
        %1342 = vxpose.xlu0.c.b16.cont [4/8] 0, 128
        %1343 = vxpose.xlu0.c.b16.cont [5/8] 0, 128
        %1344 = vxpose.xlu0.c.b16.cont [6/8] 0, 128
        %1345 = vxpose.xlu0.c.b16.cont [7/8] 0, 128
        %1346 = vxpose.xlu0.c.b16.end [8/8] 0, 128
        %v1347 = vpop.trf.xlu0
        %v1348 = vpop.trf.xlu0
        %v1349 = vpop.trf.xlu0
        %v1350 = vpop.trf.xlu0
        %v1351 = vpop.trf.xlu0
        %v1352 = vpop.trf.xlu0
        %v1353 = vpop.trf.xlu0
        %v1354 = vpop.trf.xlu0
        %1355 = vxpose.xlu0.c.b16.start [1/8] %v1277, 128
        %1356 = vxpose.xlu0.c.b16.cont [2/8] 0, 128
        %1357 = vxpose.xlu0.c.b16.cont [3/8] 0, 128
        %1358 = vxpose.xlu0.c.b16.cont [4/8] 0, 128
        %1359 = vxpose.xlu0.c.b16.cont [5/8] 0, 128
        %1360 = vxpose.xlu0.c.b16.cont [6/8] 0, 128
        %1361 = vxpose.xlu0.c.b16.cont [7/8] 0, 128
        %1362 = vxpose.xlu0.c.b16.end [8/8] 0, 128
        %v1363 = vpop.trf.xlu0
        %v1364 = vpop.trf.xlu0
        %v1365 = vpop.trf.xlu0
        %v1366 = vpop.trf.xlu0
        %v1367 = vpop.trf.xlu0
        %v1368 = vpop.trf.xlu0
        %v1369 = vpop.trf.xlu0
        %v1370 = vpop.trf.xlu0
        %1371 = vxpose.xlu0.c.b16.start [1/8] %v1281, 128
        %1372 = vxpose.xlu0.c.b16.cont [2/8] 0, 128
        %1373 = vxpose.xlu0.c.b16.cont [3/8] 0, 128
        %1374 = vxpose.xlu0.c.b16.cont [4/8] 0, 128
        %1375 = vxpose.xlu0.c.b16.cont [5/8] 0, 128
        %1376 = vxpose.xlu0.c.b16.cont [6/8] 0, 128
        %1377 = vxpose.xlu0.c.b16.cont [7/8] 0, 128
        %1378 = vxpose.xlu0.c.b16.end [8/8] 0, 128
        %v1379 = vpop.trf.xlu0
        %v1380 = vpop.trf.xlu0
        %v1381 = vpop.trf.xlu0
        %v1382 = vpop.trf.xlu0
        %v1383 = vpop.trf.xlu0
        %v1384 = vpop.trf.xlu0
        %v1385 = vpop.trf.xlu0
        %v1386 = vpop.trf.xlu0
        %1387 = vxpose.xlu0.c.b16.start [1/8] %v1285, 128
        %1388 = vxpose.xlu0.c.b16.cont [2/8] 0, 128
        %1389 = vxpose.xlu0.c.b16.cont [3/8] 0, 128
        %1390 = vxpose.xlu0.c.b16.cont [4/8] 0, 128
        %1391 = vxpose.xlu0.c.b16.cont [5/8] 0, 128
        %1392 = vxpose.xlu0.c.b16.cont [6/8] 0, 128
        %1393 = vxpose.xlu0.c.b16.cont [7/8] 0, 128
        %1394 = vxpose.xlu0.c.b16.end [8/8] 0, 128
        %v1395 = vpop.trf.xlu0
        %v1396 = vpop.trf.xlu0
        %v1397 = vpop.trf.xlu0
        %v1398 = vpop.trf.xlu0
        %v1399 = vpop.trf.xlu0
        %v1400 = vpop.trf.xlu0
        %v1401 = vpop.trf.xlu0
        %v1402 = vpop.trf.xlu0
        %1403 = vxpose.xlu0.c.b16.start [1/8] %v1289, 128
        %1404 = vxpose.xlu0.c.b16.cont [2/8] 0, 128
        %1405 = vxpose.xlu0.c.b16.cont [3/8] 0, 128
        %1406 = vxpose.xlu0.c.b16.cont [4/8] 0, 128
        %1407 = vxpose.xlu0.c.b16.cont [5/8] 0, 128
        %1408 = vxpose.xlu0.c.b16.cont [6/8] 0, 128
        %1409 = vxpose.xlu0.c.b16.cont [7/8] 0, 128
        %1410 = vxpose.xlu0.c.b16.end [8/8] 0, 128
        %v1411 = vpop.trf.xlu0
        %v1412 = vpop.trf.xlu0
        %v1413 = vpop.trf.xlu0
        %v1414 = vpop.trf.xlu0
        %v1415 = vpop.trf.xlu0
        %v1416 = vpop.trf.xlu0
        %v1417 = vpop.trf.xlu0
        %v1418 = vpop.trf.xlu0
        %v1419 = vrot.slane %v1363, 4
        %v1420 = vsel %vm1203, %v1419, %v1299
        %v1422 = vunpack.c.l.s4 1983009808
        %v1423 = vunpack.c.0.s8 %v1422
        %v1424 = vperm.slane %v1420, %v1423
        %v1425 = vrot.slane %v1395, 4
        %v1426 = vsel %vm1203, %v1425, %v1331
        %v1428 = vunpack.c.l.s4 1983009808
        %v1429 = vunpack.c.0.s8 %v1428
        %v1430 = vperm.slane %v1426, %v1429
        %v1431 = vrot.slane %v1430, 4
        %v1432 = vsel %vm1203, %v1431, %v1424
        %v1434 = vunpack.c.l.s4 1934713408
        %v1435 = vunpack.c.0.s8 %v1434
        %v1436 = vperm.slane %v1432, %v1435
        %v1437 = vrot.slane %v1436, 4
        %v1438 = vsel %vm1203, 0, %v1437
        %v1439 = vrot.slane %v1379, 4
        %v1440 = vsel %vm1203, %v1439, %v1315
        %v1442 = vunpack.c.l.s4 1983009808
        %v1443 = vunpack.c.0.s8 %v1442
        %v1444 = vperm.slane %v1440, %v1443
        %v1445 = vrot.slane %v1411, 4
        %v1446 = vsel %vm1203, %v1445, %v1347
        %v1448 = vunpack.c.l.s4 1983009808
        %v1449 = vunpack.c.0.s8 %v1448
        %v1450 = vperm.slane %v1446, %v1449
        %v1451 = vrot.slane %v1450, 4
        %v1452 = vsel %vm1203, %v1451, %v1444
        %v1454 = vunpack.c.l.s4 1934713408
        %v1455 = vunpack.c.0.s8 %v1454
        %v1456 = vperm.slane %v1452, %v1455
        %v1457 = vrot.slane %v1456, 4
        %v1458 = vsel %vm1203, 0, %v1457
        %v1461 = vpack.i.b16 %v1456, %v1436
        %v1462 = vshrl.u32 %v1436, 16
        %v1463 = vshrl.u32 %v1456, 16
        %v1464 = vpack.i.b16 %v1463, %v1462
        %v1467 = vpack.i.b16 %v1458, %v1438
        %v1468 = vshrl.u32 %v1438, 16
        %v1469 = vshrl.u32 %v1458, 16
        %v1470 = vpack.i.b16 %v1469, %v1468
        %v1472 = vsel %vm666, %v1018, 0
        %v1475 = vsel %vm670, %v1461, 0
        %1477 = vmatpush.bf16.msra.mxu0 0
        %1478 = vmatpush.bf16.msra.mxu0 0
        %1479 = vmatpush.bf16.msra.mxu0 0
        %1480 = vmatpush.bf16.msra.mxu0 0
        %1481 = vmatpush.bf16.msra.mxu0 0
        %1482 = vmatpush.bf16.msra.mxu0 0
        %1483 = vmatpush.bf16.msra.mxu0 0
        %1484 = vmatpush.bf16.msra.mxu0 %v1475
        %1485 = vmatmul.bf16.gmra.mxu0 %v1472
        %v1486 = vpop.f32.mrf.mxu0
        %v1487 = vadd.f32 0.0, %v1486
        %v1488 = vpop.f32.mrf.mxu0
        %1489 = vdwg.mxu0
        %v1491 = vsel %vm666, %v1034, 0
        %v1494 = vsel %vm670, %v1464, 0
        %1496 = vmatpush.bf16.msra.mxu0 0
        %1497 = vmatpush.bf16.msra.mxu0 0
        %1498 = vmatpush.bf16.msra.mxu0 0
        %1499 = vmatpush.bf16.msra.mxu0 0
        %1500 = vmatpush.bf16.msra.mxu0 0
        %1501 = vmatpush.bf16.msra.mxu0 0
        %1502 = vmatpush.bf16.msra.mxu0 0
        %1503 = vmatpush.bf16.msra.mxu0 %v1494
        %1504 = vmatmul.bf16.gmra.mxu0 %v1491
        %v1505 = vpop.f32.mrf.mxu0
        %v1506 = vadd.f32 0.0, %v1505
        %v1507 = vpop.f32.mrf.mxu0
        %1508 = vdwg.mxu0
        %v1510 = vsel %vm666, %v1050, 0
        %v1513 = vsel %vm670, %v1467, 0
        %1515 = vmatpush.bf16.msra.mxu0 0
        %1516 = vmatpush.bf16.msra.mxu0 0
        %1517 = vmatpush.bf16.msra.mxu0 0
        %1518 = vmatpush.bf16.msra.mxu0 0
        %1519 = vmatpush.bf16.msra.mxu0 0
        %1520 = vmatpush.bf16.msra.mxu0 0
        %1521 = vmatpush.bf16.msra.mxu0 0
        %1522 = vmatpush.bf16.msra.mxu0 %v1513
        %1523 = vmatmul.bf16.gmra.mxu0 %v1510
        %v1524 = vpop.f32.mrf.mxu0
        %v1525 = vadd.f32 0.0, %v1524
        %v1526 = vpop.f32.mrf.mxu0
        %1527 = vdwg.mxu0
        %v1529 = vsel %vm666, %v1066, 0
        %v1532 = vsel %vm670, %v1470, 0
        %1534 = vmatpush.bf16.msra.mxu0 0
        %1535 = vmatpush.bf16.msra.mxu0 0
        %1536 = vmatpush.bf16.msra.mxu0 0
        %1537 = vmatpush.bf16.msra.mxu0 0
        %1538 = vmatpush.bf16.msra.mxu0 0
        %1539 = vmatpush.bf16.msra.mxu0 0
        %1540 = vmatpush.bf16.msra.mxu0 0
        %1541 = vmatpush.bf16.msra.mxu0 %v1532
        %1542 = vmatmul.bf16.gmra.mxu0 %v1529
        %v1543 = vpop.f32.mrf.mxu0
        %v1544 = vadd.f32 0.0, %v1543
        %v1545 = vpop.f32.mrf.mxu0
        %1546 = vdwg.mxu0
        %1547 = vxpose.xlu0.b32.start [1/16] %v1487, 128
        %1548 = vxpose.xlu0.b32.cont [2/16] 0.0, 128
        %1549 = vxpose.xlu0.b32.cont [3/16] 0.0, 128
        %1550 = vxpose.xlu0.b32.cont [4/16] 0.0, 128
        %1551 = vxpose.xlu0.b32.cont [5/16] 0.0, 128
        %1552 = vxpose.xlu0.b32.cont [6/16] 0.0, 128
        %1553 = vxpose.xlu0.b32.cont [7/16] 0.0, 128
        %1554 = vxpose.xlu0.b32.cont [8/16] 0.0, 128
        %1555 = vxpose.xlu0.b32.cont [9/16] 0.0, 128
        %1556 = vxpose.xlu0.b32.cont [10/16] 0.0, 128
        %1557 = vxpose.xlu0.b32.cont [11/16] 0.0, 128
        %1558 = vxpose.xlu0.b32.cont [12/16] 0.0, 128
        %1559 = vxpose.xlu0.b32.cont [13/16] 0.0, 128
        %1560 = vxpose.xlu0.b32.cont [14/16] 0.0, 128
        %1561 = vxpose.xlu0.b32.cont [15/16] 0.0, 128
        %1562 = vxpose.xlu0.b32.end [16/16] 0.0, 128
        %v1563 = vpop.trf.xlu0
        %v1564 = vpop.trf.xlu0
        %v1565 = vpop.trf.xlu0
        %v1566 = vpop.trf.xlu0
        %v1567 = vpop.trf.xlu0
        %v1568 = vpop.trf.xlu0
        %v1569 = vpop.trf.xlu0
        %v1570 = vpop.trf.xlu0
        %v1571 = vpop.trf.xlu0
        %v1572 = vpop.trf.xlu0
        %v1573 = vpop.trf.xlu0
        %v1574 = vpop.trf.xlu0
        %v1575 = vpop.trf.xlu0
        %v1576 = vpop.trf.xlu0
        %v1577 = vpop.trf.xlu0
        %v1578 = vpop.trf.xlu0
        %1579 = vxpose.xlu0.b32.start [1/16] %v1506, 128
        %1580 = vxpose.xlu0.b32.cont [2/16] 0.0, 128
        %1581 = vxpose.xlu0.b32.cont [3/16] 0.0, 128
        %1582 = vxpose.xlu0.b32.cont [4/16] 0.0, 128
        %1583 = vxpose.xlu0.b32.cont [5/16] 0.0, 128
        %1584 = vxpose.xlu0.b32.cont [6/16] 0.0, 128
        %1585 = vxpose.xlu0.b32.cont [7/16] 0.0, 128
        %1586 = vxpose.xlu0.b32.cont [8/16] 0.0, 128
        %1587 = vxpose.xlu0.b32.cont [9/16] 0.0, 128
        %1588 = vxpose.xlu0.b32.cont [10/16] 0.0, 128
        %1589 = vxpose.xlu0.b32.cont [11/16] 0.0, 128
        %1590 = vxpose.xlu0.b32.cont [12/16] 0.0, 128
        %1591 = vxpose.xlu0.b32.cont [13/16] 0.0, 128
        %1592 = vxpose.xlu0.b32.cont [14/16] 0.0, 128
        %1593 = vxpose.xlu0.b32.cont [15/16] 0.0, 128
        %1594 = vxpose.xlu0.b32.end [16/16] 0.0, 128
        %v1595 = vpop.trf.xlu0
        %v1596 = vpop.trf.xlu0
        %v1597 = vpop.trf.xlu0
        %v1598 = vpop.trf.xlu0
        %v1599 = vpop.trf.xlu0
        %v1600 = vpop.trf.xlu0
        %v1601 = vpop.trf.xlu0
        %v1602 = vpop.trf.xlu0
        %v1603 = vpop.trf.xlu0
        %v1604 = vpop.trf.xlu0
        %v1605 = vpop.trf.xlu0
        %v1606 = vpop.trf.xlu0
        %v1607 = vpop.trf.xlu0
        %v1608 = vpop.trf.xlu0
        %v1609 = vpop.trf.xlu0
        %v1610 = vpop.trf.xlu0
        %1611 = vxpose.xlu0.b32.start [1/16] %v1525, 128
        %1612 = vxpose.xlu0.b32.cont [2/16] 0.0, 128
        %1613 = vxpose.xlu0.b32.cont [3/16] 0.0, 128
        %1614 = vxpose.xlu0.b32.cont [4/16] 0.0, 128
        %1615 = vxpose.xlu0.b32.cont [5/16] 0.0, 128
        %1616 = vxpose.xlu0.b32.cont [6/16] 0.0, 128
        %1617 = vxpose.xlu0.b32.cont [7/16] 0.0, 128
        %1618 = vxpose.xlu0.b32.cont [8/16] 0.0, 128
        %1619 = vxpose.xlu0.b32.cont [9/16] 0.0, 128
        %1620 = vxpose.xlu0.b32.cont [10/16] 0.0, 128
        %1621 = vxpose.xlu0.b32.cont [11/16] 0.0, 128
        %1622 = vxpose.xlu0.b32.cont [12/16] 0.0, 128
        %1623 = vxpose.xlu0.b32.cont [13/16] 0.0, 128
        %1624 = vxpose.xlu0.b32.cont [14/16] 0.0, 128
        %1625 = vxpose.xlu0.b32.cont [15/16] 0.0, 128
        %1626 = vxpose.xlu0.b32.end [16/16] 0.0, 128
        %v1627 = vpop.trf.xlu0
        %v1628 = vpop.trf.xlu0
        %v1629 = vpop.trf.xlu0
        %v1630 = vpop.trf.xlu0
        %v1631 = vpop.trf.xlu0
        %v1632 = vpop.trf.xlu0
        %v1633 = vpop.trf.xlu0
        %v1634 = vpop.trf.xlu0
        %v1635 = vpop.trf.xlu0
        %v1636 = vpop.trf.xlu0
        %v1637 = vpop.trf.xlu0
        %v1638 = vpop.trf.xlu0
        %v1639 = vpop.trf.xlu0
        %v1640 = vpop.trf.xlu0
        %v1641 = vpop.trf.xlu0
        %v1642 = vpop.trf.xlu0
        %1643 = vxpose.xlu0.b32.start [1/16] %v1544, 128
        %1644 = vxpose.xlu0.b32.cont [2/16] 0.0, 128
        %1645 = vxpose.xlu0.b32.cont [3/16] 0.0, 128
        %1646 = vxpose.xlu0.b32.cont [4/16] 0.0, 128
        %1647 = vxpose.xlu0.b32.cont [5/16] 0.0, 128
        %1648 = vxpose.xlu0.b32.cont [6/16] 0.0, 128
        %1649 = vxpose.xlu0.b32.cont [7/16] 0.0, 128
        %1650 = vxpose.xlu0.b32.cont [8/16] 0.0, 128
        %1651 = vxpose.xlu0.b32.cont [9/16] 0.0, 128
        %1652 = vxpose.xlu0.b32.cont [10/16] 0.0, 128
        %1653 = vxpose.xlu0.b32.cont [11/16] 0.0, 128
        %1654 = vxpose.xlu0.b32.cont [12/16] 0.0, 128
        %1655 = vxpose.xlu0.b32.cont [13/16] 0.0, 128
        %1656 = vxpose.xlu0.b32.cont [14/16] 0.0, 128
        %1657 = vxpose.xlu0.b32.cont [15/16] 0.0, 128
        %1658 = vxpose.xlu0.b32.end [16/16] 0.0, 128
        %v1659 = vpop.trf.xlu0
        %v1660 = vpop.trf.xlu0
        %v1661 = vpop.trf.xlu0
        %v1662 = vpop.trf.xlu0
        %v1663 = vpop.trf.xlu0
        %v1664 = vpop.trf.xlu0
        %v1665 = vpop.trf.xlu0
        %v1666 = vpop.trf.xlu0
        %v1667 = vpop.trf.xlu0
        %v1668 = vpop.trf.xlu0
        %v1669 = vpop.trf.xlu0
        %v1670 = vpop.trf.xlu0
        %v1671 = vpop.trf.xlu0
        %v1672 = vpop.trf.xlu0
        %v1673 = vpop.trf.xlu0
        %v1674 = vpop.trf.xlu0
        %v1675 = vrot.slane %v1627, 4
        %v1676 = vsel %vm873, %v1675, %v1563
        %v1677 = vrot.slane %v1563, 4
        %v1678 = vsel %vm873, %v1627, %v1677
        %v1680 = vunpack.c.l.s4 1983009808
        %v1681 = vunpack.c.0.s8 %v1680
        %v1682 = vperm.slane %v1676, %v1681
        %v1684 = vunpack.c.l.s4 1983009808
        %v1685 = vunpack.c.0.s8 %v1684
        %v1686 = vperm.slane %v1678, %v1685
        %v1687 = vrot.slane %v1659, 4
        %v1688 = vsel %vm873, %v1687, %v1595
        %v1689 = vrot.slane %v1595, 4
        %v1690 = vsel %vm873, %v1659, %v1689
        %v1692 = vunpack.c.l.s4 1983009808
        %v1693 = vunpack.c.0.s8 %v1692
        %v1694 = vperm.slane %v1688, %v1693
        %v1696 = vunpack.c.l.s4 1983009808
        %v1697 = vunpack.c.0.s8 %v1696
        %v1698 = vperm.slane %v1690, %v1697
        %v1699 = vrot.slane %v1694, 4
        %v1700 = vsel %vm873, %v1699, %v1682
        %v1701 = vrot.slane %v1682, 4
        %v1702 = vsel %vm873, %v1694, %v1701
        %v1704 = vunpack.c.l.s4 1934713408
        %v1705 = vunpack.c.0.s8 %v1704
        %v1706 = vperm.slane %v1700, %v1705
        %v1708 = vunpack.c.l.s4 1934713408
        %v1709 = vunpack.c.0.s8 %v1708
        %v1710 = vperm.slane %v1702, %v1709
        %v1711 = vrot.slane %v1698, 4
        %v1712 = vsel %vm873, %v1711, %v1686
        %v1713 = vrot.slane %v1686, 4
        %v1714 = vsel %vm873, %v1698, %v1713
        %v1716 = vunpack.c.l.s4 1934713408
        %v1717 = vunpack.c.0.s8 %v1716
        %v1718 = vperm.slane %v1712, %v1717
        %v1720 = vunpack.c.l.s4 1934713408
        %v1721 = vunpack.c.0.s8 %v1720
        %v1722 = vperm.slane %v1714, %v1721
        %v1723 = vrot.slane %v1706, 4
        %v1724 = vsel %vm873, 0.0, %v1723
        %v1725 = vrot.slane %v1710, 4
        %v1726 = vsel %vm873, 0.0, %v1725
        %v1727 = vrot.slane %v1718, 4
        %v1728 = vsel %vm873, 0.0, %v1727
        %v1729 = vrot.slane %v1722, 4
        %v1730 = vsel %vm873, 0.0, %v1729
        %v1731 = vrcp.pop %v980
        %v1732 = vmul.f32 %v980, %v1731
        %v1733 = vsub.f32 1.0, %v1732
        %v1734 = vmul.f32 %v1731, %v1733
        %v1735 = vadd.f32 %v1731, %v1734
        %vm1736 = vweird.f32 %v980
        %vm1737 = vweird.f32 %v1731
        %vm1738 = vmor %vm1736, %vm1737
        %v1739 = vsel %vm1738, %v1731, %v1735
        %v1740 = vand.u32 2147483647, %v980
        %vm1741 = vcmp.eq.f32.partialorder %v1740, 8.507059e+37
        %v1742 = vand.u32 %v980, 2147483648
        %v1743 = vor.u32 1.1754944e-38, %v1742
        %v1744 = vsel %vm1741, %v1743, %v1739
        %v1745 = vrcp.pop %v983
        %v1746 = vmul.f32 %v983, %v1745
        %v1747 = vsub.f32 1.0, %v1746
        %v1748 = vmul.f32 %v1745, %v1747
        %v1749 = vadd.f32 %v1745, %v1748
        %vm1750 = vweird.f32 %v983
        %vm1751 = vweird.f32 %v1745
        %vm1752 = vmor %vm1750, %vm1751
        %v1753 = vsel %vm1752, %v1745, %v1749
        %v1754 = vand.u32 2147483647, %v983
        %vm1755 = vcmp.eq.f32.partialorder %v1754, 8.507059e+37
        %v1756 = vand.u32 %v983, 2147483648
        %v1757 = vor.u32 1.1754944e-38, %v1756
        %v1758 = vsel %vm1755, %v1757, %v1753
        %v1759 = vrcp.pop %v986
        %v1760 = vmul.f32 %v986, %v1759
        %v1761 = vsub.f32 1.0, %v1760
        %v1762 = vmul.f32 %v1759, %v1761
        %v1763 = vadd.f32 %v1759, %v1762
        %vm1764 = vweird.f32 %v986
        %vm1765 = vweird.f32 %v1759
        %vm1766 = vmor %vm1764, %vm1765
        %v1767 = vsel %vm1766, %v1759, %v1763
        %v1768 = vand.u32 2147483647, %v986
        %vm1769 = vcmp.eq.f32.partialorder %v1768, 8.507059e+37
        %v1770 = vand.u32 %v986, 2147483648
        %v1771 = vor.u32 1.1754944e-38, %v1770
        %v1772 = vsel %vm1769, %v1771, %v1767
        %v1773 = vrcp.pop %v989
        %v1774 = vmul.f32 %v989, %v1773
        %v1775 = vsub.f32 1.0, %v1774
        %v1776 = vmul.f32 %v1773, %v1775
        %v1777 = vadd.f32 %v1773, %v1776
        %vm1778 = vweird.f32 %v989
        %vm1779 = vweird.f32 %v1773
        %vm1780 = vmor %vm1778, %vm1779
        %v1781 = vsel %vm1780, %v1773, %v1777
        %v1782 = vand.u32 2147483647, %v989
        %vm1783 = vcmp.eq.f32.partialorder %v1782, 8.507059e+37
        %v1784 = vand.u32 %v989, 2147483648
        %v1785 = vor.u32 1.1754944e-38, %v1784
        %v1786 = vsel %vm1783, %v1785, %v1781
        %v1787 = vrcp.pop %v992
        %v1788 = vmul.f32 %v992, %v1787
        %v1789 = vsub.f32 1.0, %v1788
        %v1790 = vmul.f32 %v1787, %v1789
        %v1791 = vadd.f32 %v1787, %v1790
        %vm1792 = vweird.f32 %v992
        %vm1793 = vweird.f32 %v1787
        %vm1794 = vmor %vm1792, %vm1793
        %v1795 = vsel %vm1794, %v1787, %v1791
        %v1796 = vand.u32 2147483647, %v992
        %vm1797 = vcmp.eq.f32.partialorder %v1796, 8.507059e+37
        %v1798 = vand.u32 %v992, 2147483648
        %v1799 = vor.u32 1.1754944e-38, %v1798
        %v1800 = vsel %vm1797, %v1799, %v1795
        %v1801 = vrcp.pop %v995
        %v1802 = vmul.f32 %v995, %v1801
        %v1803 = vsub.f32 1.0, %v1802
        %v1804 = vmul.f32 %v1801, %v1803
        %v1805 = vadd.f32 %v1801, %v1804
        %vm1806 = vweird.f32 %v995
        %vm1807 = vweird.f32 %v1801
        %vm1808 = vmor %vm1806, %vm1807
        %v1809 = vsel %vm1808, %v1801, %v1805
        %v1810 = vand.u32 2147483647, %v995
        %vm1811 = vcmp.eq.f32.partialorder %v1810, 8.507059e+37
        %v1812 = vand.u32 %v995, 2147483648
        %v1813 = vor.u32 1.1754944e-38, %v1812
        %v1814 = vsel %vm1811, %v1813, %v1809
        %v1815 = vrcp.pop %v998
        %v1816 = vmul.f32 %v998, %v1815
        %v1817 = vsub.f32 1.0, %v1816
        %v1818 = vmul.f32 %v1815, %v1817
        %v1819 = vadd.f32 %v1815, %v1818
        %vm1820 = vweird.f32 %v998
        %vm1821 = vweird.f32 %v1815
        %vm1822 = vmor %vm1820, %vm1821
        %v1823 = vsel %vm1822, %v1815, %v1819
        %v1824 = vand.u32 2147483647, %v998
        %vm1825 = vcmp.eq.f32.partialorder %v1824, 8.507059e+37
        %v1826 = vand.u32 %v998, 2147483648
        %v1827 = vor.u32 1.1754944e-38, %v1826
        %v1828 = vsel %vm1825, %v1827, %v1823
        %v1829 = vrcp.pop %v1001
        %v1830 = vmul.f32 %v1001, %v1829
        %v1831 = vsub.f32 1.0, %v1830
        %v1832 = vmul.f32 %v1829, %v1831
        %v1833 = vadd.f32 %v1829, %v1832
        %vm1834 = vweird.f32 %v1001
        %vm1835 = vweird.f32 %v1829
        %vm1836 = vmor %vm1834, %vm1835
        %v1837 = vsel %vm1836, %v1829, %v1833
        %v1838 = vand.u32 2147483647, %v1001
        %vm1839 = vcmp.eq.f32.partialorder %v1838, 8.507059e+37
        %v1840 = vand.u32 %v1001, 2147483648
        %v1841 = vor.u32 1.1754944e-38, %v1840
        %v1842 = vsel %vm1839, %v1841, %v1837
        %v1843 = vmul.f32 %v1706, %v1744
        %v1844 = vmul.f32 %v1724, %v1758
        %v1845 = vmul.f32 %v1710, %v1772
        %v1846 = vmul.f32 %v1726, %v1786
        %v1847 = vmul.f32 %v1718, %v1800
        %v1848 = vmul.f32 %v1728, %v1814
        %v1849 = vmul.f32 %v1722, %v1828
        %v1850 = vmul.f32 %v1730, %v1842
        %v1851 = vrot.slane %v1845, 4
        %v1852 = vsel %vm873, %v1851, %v1843
        %v1854 = vunpack.c.l.s4 1983009808
        %v1855 = vunpack.c.0.s8 %v1854
        %v1856 = vperm.slane %v1852, %v1855
        %v1857 = vrot.slane %v1846, 4
        %v1858 = vsel %vm873, %v1857, %v1844
        %v1860 = vunpack.c.l.s4 1983009808
        %v1861 = vunpack.c.0.s8 %v1860
        %v1862 = vperm.slane %v1858, %v1861
        %v1863 = vrot.slane %v1849, 4
        %v1864 = vsel %vm873, %v1863, %v1847
        %v1866 = vunpack.c.l.s4 1983009808
        %v1867 = vunpack.c.0.s8 %v1866
        %v1868 = vperm.slane %v1864, %v1867
        %v1869 = vrot.slane %v1850, 4
        %v1870 = vsel %vm873, %v1869, %v1848
        %v1872 = vunpack.c.l.s4 1983009808
        %v1873 = vunpack.c.0.s8 %v1872
        %v1874 = vperm.slane %v1870, %v1873
        %v1875 = vrot.slane %v1862, 4
        %v1876 = vsel %vm873, %v1875, %v1856
        %v1877 = vrot.slane %v1856, 4
        %v1878 = vsel %vm873, %v1862, %v1877
        %v1880 = vunpack.c.l.s4 1934713408
        %v1881 = vunpack.c.0.s8 %v1880
        %v1882 = vperm.slane %v1876, %v1881
        %v1884 = vunpack.c.l.s4 1934713408
        %v1885 = vunpack.c.0.s8 %v1884
        %v1886 = vperm.slane %v1878, %v1885
        %v1887 = vrot.slane %v1874, 4
        %v1888 = vsel %vm873, %v1887, %v1868
        %v1889 = vrot.slane %v1868, 4
        %v1890 = vsel %vm873, %v1874, %v1889
        %v1892 = vunpack.c.l.s4 1934713408
        %v1893 = vunpack.c.0.s8 %v1892
        %v1894 = vperm.slane %v1888, %v1893
        %v1896 = vunpack.c.l.s4 1934713408
        %v1897 = vunpack.c.0.s8 %v1896
        %v1898 = vperm.slane %v1890, %v1897
        %v1899 = vrot.slane %v1894, 4
        %v1900 = vsel %vm873, %v1899, %v1882
        %v1901 = vrot.slane %v1882, 4
        %v1902 = vsel %vm873, %v1894, %v1901
        %v1903 = vrot.slane %v1898, 4
        %v1904 = vsel %vm873, %v1903, %v1886
        %v1905 = vrot.slane %v1886, 4
        %v1906 = vsel %vm873, %v1898, %v1905
        %1908 = vrot.lane.b32.xlu0 %v1902, 8
        %v1909 = vpop.permute.xlu0 %1908
        %1912 = vrot.lane.b32.xlu0 %v1904, 16
        %v1913 = vpop.permute.xlu0 %1912
        %1916 = vrot.lane.b32.xlu0 %v1906, 24
        %v1917 = vpop.permute.xlu0 %1916
        %v1919 = vsel %vm666, %v1900, %v1909
        %vm1920 = vcmask 130048
        %v1921 = vsel %vm1920, %v1919, %v1913
        %vm1922 = vcmask 195584
        %v1923 = vsel %vm1922, %v1921, %v1917
        %v1924 = vpack.c.bf16 %v1923, %v1923
        %v1925 = vld [vmem:[#allocation12] sm:$0xf]
        %v1926 = vld [vmem:[#allocation12 + $0x4] sm:$0xf]
        %v1927 = vld [vmem:[#allocation12 + $0x8] sm:$0xf]
        %v1928 = vld [vmem:[#allocation12 + $0xc] sm:$0xf]
        %v1929 = vld [vmem:[%s7] sm:$0x1]
        %v1931 = vperm.slane %v1929, 0
        %v1937 = vunpack.c.l.b16 %v1925
        %v1938 = vunpack.c.l.b16 %v1926
        %v1939 = vunpack.c.l.b16 %v1927
        %v1940 = vunpack.c.l.b16 %v1928
        %v1941 = vpack.c.b16 %v1938, %v1937
        %v1942 = vpack.c.b16 %v1940, %v1939
        %v1946 = vsel %vm555, %v1924, 0
        %1948 = vmatpush.bf16.msra.mxu0 0
        %1949 = vmatpush.bf16.msra.mxu0 0
        %1950 = vmatpush.bf16.msra.mxu0 0
        %1951 = vmatpush.bf16.msra.mxu0 0
        %1952 = vmatpush.bf16.msra.mxu0 0
        %1953 = vmatpush.bf16.msra.mxu0 0
        %1954 = vmatpush.bf16.msra.mxu0 %v1942
        %1955 = vmatpush.bf16.msra.mxu0 %v1941
        %1956 = vmatmul.bf16.gmra.mxu0 %v1946
        %v1957 = vpop.f32.mrf.mxu0
        %v1958 = vadd.f32 %v1931, %v1957
        %v1959 = vpop.f32.mrf.mxu0
        %1960 = vdwg.mxu0
        %v1961 = vadd.f32 %v1958, %v533
        %v1962 = vsel %vm555, %v1961, 0.0
        %1963 = vadd.xlane.f32.xlu0 %v1962
        %v1964 = vpop.xlane.xlu0 %1963
        %v1965 = vrcp.pop 32.0
        %v1966 = vmul.f32 32.0, %v1965
        %v1967 = vsub.f32 1.0, %v1966
        %v1968 = vmul.f32 %v1965, %v1967
        %v1969 = vadd.f32 %v1965, %v1968
        %vm1970 = vweird.f32 %v1965
        %v1971 = vsel %vm1970, %v1965, %v1969
        %v1972 = vmul.f32 %v1964, %v1971
        %v1973 = vsub.f32 %v1961, %v1972
        %v1974 = vmul.f32 %v1973, %v1973
        %v1975 = vsel %vm555, %v1974, 0.0
        %1976 = vadd.xlane.f32.xlu0 %v1975
        %v1977 = vpop.xlane.xlu0 %1976
        %v1978 = vmul.f32 %v1977, %v1971
        %v1979 = vadd.f32 %v1978, 1e-12
        %v1980 = vrsqrt.pop %v1979
        %v1981 = vmul.f32 %v1980, %v1979
        %v1982 = vmul.f32 %v1981, %v1980
        %v1983 = vmul.f32 0.5, %v1982
        %v1984 = vsub.f32 1.5, %v1983
        %v1985 = vmul.f32 %v1980, %v1984
        %vm1986 = vweird.f32 %v1979
        %vm1987 = vweird.f32 %v1980
        %vm1988 = vmor %vm1986, %vm1987
        %v1989 = vsel %vm1988, %v1980, %v1985
        %v1990 = vmul.f32 %v1973, %v1989
        %v1991 = vld [vmem:[%s8] sm:$0x1]
        %v1993 = vperm.slane %v1991, 0
        %v1995 = vmul.f32 %v1990, %v1993
        %v1996 = vld [vmem:[%s9] sm:$0x1]
        %v1998 = vperm.slane %v1996, 0
        %v2000 = vadd.f32 %v1995, %v1998
        %2001 = vst.msk [vmem:[%s481] sm:$0xff] %vm555, %v2000
        %s2002 = sand.u32 %s275, 1
        %s2003 = scalar_lea.sflag [#allocation6], %s2002
        %s2004 = sand.u32 %s275, 1
        %s2005 = smul.addr %s2004, 8
        %s2006 = scalar_lea.vmem [#allocation13], %s2005
        // Predicated region
        $region85: #{tpu_custom_call.1} parent=59 // pred_check
          %p2007 = pneg %p285
        $region86: #{tpu_custom_call.1} parent=59 // pred_check_branch
          %2009 = sbr.rel (%p2007) target = $region88
        $region87: #{tpu_custom_call.1} parent=59 // pred_region
          %2011 = vsyncadd %s2003, 0
          %s2012 = sadd.s32 %s36, %s35
          %s2013 = smul.addr %s2012, 8
          %s2014 = scalar_lea.hbm %s10, %s2013
          %s2016 = sshll.u32 %s2006, 4
          %s2017 = int_to_ptr.vmem [resolvable:$true] %s2016
          %s2018 = sshll.u32 %s2014, 4
          %s2019 = int_to_ptr.hbm [resolvable:$true] %s2018
          %2021 = dma.vmem_to_hbm [thread:$0]  %s2017, 128, %s2019, %s2003
        $region88: #{tpu_custom_call.1} parent=59 // pred_fallthru
          _
      $region60: #{tpu_custom_call.1} parent=5 // pred_fallthru
        _
      %p2022 = scmp.le.s32.totalorder 2, %s26
      // Predicated region
      $region89: #{tpu_custom_call.1} parent=5 // pred_check
        %p2023 = pneg %p2022
      $region90: #{tpu_custom_call.1} parent=5 // pred_check_branch
        %2025 = sbr.rel (%p2023) target = $region92
      $region91: #{tpu_custom_call.1} parent=5 // pred_region
        %s2026 = ssub.s32 %s26, 2
        // Predicated region
        $region93: #{tpu_custom_call.1} parent=91 // pred_check
          %p2027 = pneg %p291
        $region94: #{tpu_custom_call.1} parent=91 // pred_check_branch
          %2029 = sbr.rel (%p2027) target = $region96
        $region95: #{tpu_custom_call.1} parent=91 // pred_region
          %s2030 = sand.u32 %s276, 1
          %s2031 = scalar_lea.sflag [#allocation6], %s2030
          %s2032 = sand.u32 %s276, 1
          %s2033 = smul.addr %s2032, 8
          %s2034 = scalar_lea.vmem [#allocation13], %s2033
          %2036 = dma.done %s2031, 128
        $region96: #{tpu_custom_call.1} parent=91 // pred_fallthru
          _
      $region92: #{tpu_custom_call.1} parent=5 // pred_fallthru
        _
    $region6: #{tpu_custom_call.1} parent=1 // loop_footer
      %s30 = sadd.s32 1, %s26
    $region7: #{tpu_custom_call.1} parent=1 // loop_footer_branch
      %25 = sbr.rel target = $region3
    $region8: #{tpu_custom_call.1} parent=1 // loop_exit
      _
    %2037 = vsyncpa [#allocation5], 1
    %s2038 = scalar_lea.sflag [#allocation5], 1
    %2039 = vsyncpa %s2038, 1
    %2040 = vsyncpa [#allocation8], 1
    %s2041 = scalar_lea.sflag [#allocation8], 1
    %2042 = vsyncpa %s2041, 1
    %2043 = vsyncpa [#allocation11], 1
    %2044 = vsyncpa [#allocation6], 1
    %s2045 = scalar_lea.sflag [#allocation6], 1
    %2046 = vsyncpa %s2045, 1

</llo_original>
